<compile_context>
chip_gen: v7x
topology: tpu7x:2x2x1
jax: 0.10.0
libtpu: 0.0.40
codegen_flags: <defaults>
</compile_context>

<pallas_src>
from functools import partial

import jax
import jax.numpy as jnp
from jax.experimental import pallas as pl
from jax.experimental.pallas import tpu as pltpu

BN_EPS = 1e-5       # nn.BatchNorm2d default
COS_EPS = 1e-8      # nn.CosineSimilarity default
VMEM_LIMIT = 32 * 1024 * 1024   # explicit scoped-VMEM budget (safe on v5e/v6e/v7x)


def _pick_tile(n, target):
    """Largest row-tile <= target that divides n (prefers multiples of 8)."""
    if n <= target:
        return n
    for c in (512, 256, 128, 64, 32, 16, 8):
        if c <= target and n % c == 0:
            return c
    return n


# --------------------------------------------------------------------------
# Encoder pass 1: backbone conv (as matmul) + ReLU + proj-conv1, plus per-view
# BatchNorm statistics (sum / sumsq accumulated in VMEM scratch).
# grid = (n_views, n_row_tiles): views "parallel" (megacore), rows "arbitrary".
# --------------------------------------------------------------------------
def _enc_pass1_kernel(p_ref, w_bb_ref, b_bb_ref, w_p1_ref, bn_g_ref, bn_b_ref,
                      t_ref, stats_ref, acc_ref, *, rows_per_seg):
    r = pl.program_id(1)

    # backbone: strided conv as bf16 matmul (f32 accumulate) + bias + ReLU
    h = jnp.dot(p_ref[...], w_bb_ref[...],
                preferred_element_type=jnp.float32) + b_bb_ref[...]
    h = jnp.maximum(h, 0.0)
    # projection conv1 (1x1, no bias)
    t = jnp.dot(h.astype(jnp.bfloat16), w_p1_ref[...],
                preferred_element_type=jnp.float32)
    t_ref[...] = t

    @pl.when(r == 0)
    def _():
        acc_ref[...] = jnp.zeros_like(acc_ref)

    acc_ref[0:1, :] = acc_ref[0:1, :] + jnp.sum(t, axis=0, keepdims=True)
    acc_ref[1:2, :] = acc_ref[1:2, :] + jnp.sum(t * t, axis=0, keepdims=True)

    @pl.when(r == pl.num_programs(1) - 1)
    def _():
        inv_n = 1.0 / float(rows_per_seg)
        mean = acc_ref[0:1, :] * inv_n                      # (1, Cb)  f32
        var = acc_ref[1:2, :] * inv_n - mean * mean         # biased variance
        scale = bn_g_ref[...] * jax.lax.rsqrt(var + BN_EPS)
        shift = bn_b_ref[...] - mean * scale
        stats_ref[...] = jnp.concatenate([scale, shift], axis=0).reshape(
            stats_ref.shape)


# --------------------------------------------------------------------------
# Encoder pass 2: apply BN (precomputed scale/shift) + ReLU + proj-conv2.
# grid = (n_views, n_row_tiles), fully parallel.
# --------------------------------------------------------------------------
def _enc_pass2_kernel(t_ref, stats_ref, w_p2_ref, b_p2_ref, o_ref):
    stats = stats_ref[...]                                  # (1, 2, Cb)
    scale = stats[:, 0, :]                                  # (1, Cb)
    shift = stats[:, 1, :]                                  # (1, Cb)
    tr = jnp.maximum(t_ref[...] * scale + shift, 0.0)
    o_ref[...] = jnp.dot(tr.astype(jnp.bfloat16), w_p2_ref[...],
                         preferred_element_type=jnp.float32) + b_p2_ref[...]


def encoder_forward_tokens(patches_bf16, params, *, n_seg, rows_per_seg):
    """patches_bf16: (n_seg*rows_per_seg, Kp) bf16 -> feats (R, Cp) f32."""
    R, Kp = patches_bf16.shape
    assert R == n_seg * rows_per_seg
    Cb = params["w_p1"].shape[0]
    Cp = params["w_p2"].shape[1]

    TM = _pick_tile(rows_per_seg, 512)
    n_rt = rows_per_seg // TM
    grid = (n_seg, n_rt)

    # bf16 weight copies (halves weight DMA; biases / BN params stay f32)
    w_bb = params["w_bb"].astype(jnp.bfloat16)
    w_p1 = params["w_p1"].astype(jnp.bfloat16)
    w_p2 = params["w_p2"].astype(jnp.bfloat16)

    t, stats = pl.pallas_call(
        partial(_enc_pass1_kernel, rows_per_seg=rows_per_seg),
        grid=grid,
        in_specs=[
            pl.BlockSpec((TM, Kp), lambda v, r: (v * n_rt + r, 0)),
            pl.BlockSpec((Kp, Cb), lambda v, r: (0, 0)),
            pl.BlockSpec((1, Cb), lambda v, r: (0, 0)),
            pl.BlockSpec((Cb, Cb), lambda v, r: (0, 0)),
            pl.BlockSpec((1, Cb), lambda v, r: (0, 0)),
            pl.BlockSpec((1, Cb), lambda v, r: (0, 0)),
        ],
        out_specs=[
            pl.BlockSpec((TM, Cb), lambda v, r: (v * n_rt + r, 0)),
            pl.BlockSpec((1, 2, Cb), lambda v, r: (v, 0, 0)),
        ],
        out_shape=[
            jax.ShapeDtypeStruct((R, Cb), jnp.float32),
            jax.ShapeDtypeStruct((n_seg, 2, Cb), jnp.float32),
        ],
        scratch_shapes=[pltpu.VMEM((2, Cb), jnp.float32)],
        compiler_params=pltpu.CompilerParams(
            dimension_semantics=("parallel", "arbitrary"),
            vmem_limit_bytes=VMEM_LIMIT),
    )(patches_bf16, w_bb, params["b_bb"], w_p1, params["bn_g"], params["bn_b"])

    feats = pl.pallas_call(
        _enc_pass2_kernel,
        grid=grid,
        in_specs=[
            pl.BlockSpec((TM, Cb), lambda v, r: (v * n_rt + r, 0)),
            pl.BlockSpec((1, 2, Cb), lambda v, r: (v, 0, 0)),
            pl.BlockSpec((Cb, Cp), lambda v, r: (0, 0)),
            pl.BlockSpec((1, Cp), lambda v, r: (0, 0)),
        ],
        out_specs=pl.BlockSpec((TM, Cp), lambda v, r: (v * n_rt + r, 0)),
        out_shape=jax.ShapeDtypeStruct((R, Cp), jnp.float32),
        compiler_params=pltpu.CompilerParams(
            dimension_semantics=("parallel", "parallel"),
            vmem_limit_bytes=VMEM_LIMIT),
    )(t, stats, w_p2, params["b_p2"])
    return feats


# --------------------------------------------------------------------------
# PPM prep: row L2-normalisation (f32) + 1x1 transform gx, row-tiled over ALL
# B*N rows at once (one big matmul instead of B tiny ones).
# --------------------------------------------------------------------------
def _ppm_prep_kernel(x_ref, wt_ref, bt_ref, xn_ref, gx_ref):
    x = x_ref[...]                                          # (TM, C) f32
    inv = jax.lax.rsqrt(jnp.maximum(jnp.sum(x * x, axis=1, keepdims=True),
                                    COS_EPS * COS_EPS))     # 1/max(|x|, eps)
    xn_ref[...] = (x * inv).astype(jnp.bfloat16)
    gx = jnp.dot(x.astype(jnp.bfloat16), wt_ref[...],
                 preferred_element_type=jnp.float32) + bt_ref[...]
    gx_ref[...] = gx.astype(jnp.bfloat16)


# --------------------------------------------------------------------------
# PPM similarity: blocked over query rows.
# s_tile = relu(xn_q @ xn^T) ** gamma ;  out_tile = s_tile @ gx
# grid = (batch, n_query_tiles), fully parallel.
# --------------------------------------------------------------------------
def _ppm_sim_kernel(xnq_ref, xnk_ref, gx_ref, o_ref, *, gamma):
    s = jnp.einsum('bqc,bkc->bqk', xnq_ref[...], xnk_ref[...],
                   preferred_element_type=jnp.float32)
    s = jnp.maximum(s, 0.0)
    if float(gamma) == float(int(gamma)):
        s = s ** int(gamma)          # integer pow -> VPU multiplies (no EUP)
    else:
        s = s ** float(gamma)        # float pow -> exp/log on the single EUP
    o_ref[...] = jnp.einsum('bqk,bkc->bqc', s.astype(jnp.bfloat16), gx_ref[...],
                            preferred_element_type=jnp.float32)


def ppm_forward_tokens(feats, ppm_params, *, n_batch, n_tokens, gamma):
    """feats: (n_batch*n_tokens, C) f32 -> (n_batch, n_tokens, C) f32."""
    R, C = feats.shape
    assert R == n_batch * n_tokens
    wt = ppm_params["wt"].astype(jnp.bfloat16)
    bt = ppm_params["bt"]

    TMp = _pick_tile(R, 512)
    n_rt = R // TMp
    xn, gx = pl.pallas_call(
        _ppm_prep_kernel,
        grid=(n_rt,),
        in_specs=[pl.BlockSpec((TMp, C), lambda i: (i, 0)),
                  pl.BlockSpec((C, C), lambda i: (0, 0)),
                  pl.BlockSpec((1, C), lambda i: (0, 0))],
        out_specs=[pl.BlockSpec((TMp, C), lambda i: (i, 0)),
                   pl.BlockSpec((TMp, C), lambda i: (i, 0))],
        out_shape=[jax.ShapeDtypeStruct((R, C), jnp.bfloat16),
                   jax.ShapeDtypeStruct((R, C), jnp.bfloat16)],
        compiler_params=pltpu.CompilerParams(
            dimension_semantics=("parallel",),
            vmem_limit_bytes=VMEM_LIMIT),
    )(feats, wt, bt)

    xn_b = xn.reshape(n_batch, n_tokens, C)
    gx_b = gx.reshape(n_batch, n_tokens, C)

    TQ = _pick_tile(n_tokens, 256)
    n_qt = n_tokens // TQ
    out = pl.pallas_call(
        partial(_ppm_sim_kernel, gamma=gamma),
        grid=(n_batch, n_qt),
        in_specs=[pl.BlockSpec((1, TQ, C), lambda b, q: (b, q, 0)),
                  pl.BlockSpec((1, n_tokens, C), lambda b, q: (b, 0, 0)),
                  pl.BlockSpec((1, n_tokens, C), lambda b, q: (b, 0, 0))],
        out_specs=pl.BlockSpec((1, TQ, C), lambda b, q: (b, q, 0)),
        out_shape=jax.ShapeDtypeStruct((n_batch, n_tokens, C), jnp.float32),
        compiler_params=pltpu.CompilerParams(
            dimension_semantics=("parallel", "parallel"),
            vmem_limit_bytes=VMEM_LIMIT),
    )(xn_b, xn_b, gx_b)
    return out


# --------------------------------------------------------------------------
# AvgPool2d(ds, stride=ds) for the coordinate grids: intentionally plain XLA
# (output is 1 lane wide — a Pallas kernel here would be masked-store overhead).
# --------------------------------------------------------------------------
def avgpool_forward(grid_nchw, ds):
    B, C, H, W = grid_nchw.shape
    Ho, Wo = H // ds, W // ds
    return grid_nchw.reshape(B, C, Ho, ds, Wo, ds).mean(axis=(3, 5))


# --------------------------------------------------------------------------
# glue: patchify (strided-conv im2col) + NCHW conversion at the API boundary
# --------------------------------------------------------------------------
def _patchify(x_nchw, ds):
    """(B, Cin, H, W) -> (B*Ho*Wo, Cin*ds*ds) bf16, column order (cin, kh, kw)."""
    B, Cin, H, W = x_nchw.shape
    Ho, Wo = H // ds, W // ds
    p = x_nchw.reshape(B, Cin, Ho, ds, Wo, ds)
    p = p.transpose(0, 2, 4, 1, 3, 5).reshape(B * Ho * Wo, Cin * ds * ds)
    return p.astype(jnp.bfloat16)


# --------------------------------------------------------------------------
# PixPro forward
# --------------------------------------------------------------------------
def pixpro_forward(enc_params, mom_params, ppm_params, view1, view2,
                   view1_grid, view2_grid, *, ds, momentum, gamma):
    B, Cin, H, W = view1.shape
    Ho, Wo = H // ds, W // ds
    N = Ho * Wo
    R_seg = B * N

    # Concatenate views along the batch/row axis and run each encoder ONCE;
    # BN statistics are computed per view segment inside the kernel, matching
    # the two separate PyTorch encoder calls.
    views = jnp.concatenate([view1, view2], axis=0)         # (2B, Cin, H, W)
    patches = _patchify(views, ds)                          # (2*R_seg, Kp) bf16

    feats = encoder_forward_tokens(patches, enc_params,
                                   n_seg=2, rows_per_seg=R_seg)   # (2R, Cp) f32

    y_tokens = ppm_forward_tokens(feats, ppm_params, n_batch=2 * B,
                                  n_tokens=N, gamma=gamma)        # (2B, N, Cp)

    # momentum-encoder update (elementwise glue; torch does it in-place)
    mom_params = jax.tree_util.tree_map(
        lambda m, p: m * momentum + p * (1.0 - momentum), mom_params, enc_params)
    z_feats = encoder_forward_tokens(patches, mom_params,
                                     n_seg=2, rows_per_seg=R_seg)

    g1 = avgpool_forward(view1_grid, ds)
    g2 = avgpool_forward(view2_grid, ds)

    # Public API boundary: tokens -> NCHW (done exactly once per output).
    Cp = feats.shape[-1]

    def tok_to_nchw(tok):                                   # (B*N, Cp) -> NCHW
        return tok.reshape(B, Ho, Wo, Cp).transpose(0, 3, 1, 2)

    y_nchw = (y_tokens.transpose(0, 2, 1)
              .reshape(2 * B, Cp, Ho, Wo))
    y1, y2 = y_nchw[:B], y_nchw[B:]
    z1 = tok_to_nchw(z_feats[:R_seg])
    z2 = tok_to_nchw(z_feats[R_seg:])
    return y1, y2, z1, z2, g1, g2


# --------------------------------------------------------------------------
# deterministic parameter init (shapes implied by the module __init__)
# --------------------------------------------------------------------------
def init_encoder_params(key, cin, cb, cproj, ds):
    k = jax.random.split(key, 5)
    kp = cin * ds * ds
    return {
        "w_bb": jax.random.normal(k[0], (kp, cb), jnp.float32) / jnp.sqrt(kp),
        "b_bb": jax.random.normal(k[1], (1, cb), jnp.float32) * 0.01,
        "w_p1": jax.random.normal(k[2], (cb, cb), jnp.float32) / jnp.sqrt(cb),
        "bn_g": jnp.ones((1, cb), jnp.float32),
        "bn_b": jnp.zeros((1, cb), jnp.float32),
        "w_p2": jax.random.normal(k[3], (cb, cproj), jnp.float32) / jnp.sqrt(cb),
        "b_p2": jax.random.normal(k[4], (1, cproj), jnp.float32) * 0.01,
    }


if __name__ == "__main__":
    key = jax.random.PRNGKey(0)
    B, Cin, H, W = 2, 3, 16, 16
    ds = 4                      # small-scale stand-in for downsampling=32
    Cb, Cproj = 128, 256        # hidden width padded to a lane-dense 128
    momentum, gamma = 0.99, 2

    ks = jax.random.split(key, 8)
    enc_params = init_encoder_params(ks[0], Cin, Cb, Cproj, ds)
    mom_params = jax.tree_util.tree_map(lambda a: a, enc_params)  # deepcopy at init
    ppm_params = {
        "wt": jax.random.normal(ks[1], (Cproj, Cproj), jnp.float32) / jnp.sqrt(Cproj),
        "bt": jax.random.normal(ks[2], (1, Cproj), jnp.float32) * 0.01,
    }

    view1 = jax.random.normal(ks[3], (B, Cin, H, W), jnp.float32)
    view2 = jax.random.normal(ks[4], (B, Cin, H, W), jnp.float32)
    view1_grid = jax.random.normal(ks[5], (B, 2, H, W), jnp.float32)
    view2_grid = jax.random.normal(ks[6], (B, 2, H, W), jnp.float32)

    fwd = jax.jit(partial(pixpro_forward, ds=ds, momentum=momentum, gamma=gamma))
    y1, y2, z1, z2, g1, g2 = jax.block_until_ready(
        fwd(enc_params, mom_params, ppm_params, view1, view2,
            view1_grid, view2_grid))

    Ho, Wo = H // ds, W // ds
    assert y1.shape == (B, Cproj, Ho, Wo) and y2.shape == (B, Cproj, Ho, Wo)
    assert z1.shape == (B, Cproj, Ho, Wo) and z2.shape == (B, Cproj, Ho, Wo)
    assert g1.shape == (B, 2, Ho, Wo) and g2.shape == (B, 2, Ho, Wo)
    assert all(bool(jnp.all(jnp.isfinite(t))) for t in (y1, y2, z1, z2, g1, g2))
    print("KERNEL_OK")
</pallas_src>

<mosaic_0001>
module attributes {stable_mosaic.version = 11 : i64} {
  func.func @_enc_pass1_kernel(%arg0: i32, %arg1: i32, %arg2: memref<32x48xbf16, #tpu.memory_space<vmem>>, %arg3: memref<48x128xbf16, #tpu.memory_space<vmem>>, %arg4: memref<1x128xf32, #tpu.memory_space<vmem>>, %arg5: memref<128x128xbf16, #tpu.memory_space<vmem>>, %arg6: memref<1x128xf32, #tpu.memory_space<vmem>>, %arg7: memref<1x128xf32, #tpu.memory_space<vmem>>, %arg8: memref<32x128xf32, #tpu.memory_space<vmem>>, %arg9: memref<1x2x128xf32, #tpu.memory_space<vmem>>, %arg10: memref<2x128xf32, #tpu.memory_space<vmem>>) attributes {dimension_semantics = [#tpu.dimension_semantics<parallel>, #tpu.dimension_semantics<arbitrary>], iteration_bounds = array<i64: 2, 1>, scalar_prefetch = 0 : i64, scratch_operands = 1 : i64, tpu.core_type = #tpu.core_type<tc>, window_params = [{transform_indices = @transform_0, window_bounds = array<i64: 32, 48>}, {pipeline_mode = #tpu.pipeline_mode<synchronous>, transform_indices = @transform_1, window_bounds = array<i64: 48, 128>}, {pipeline_mode = #tpu.pipeline_mode<synchronous>, transform_indices = @transform_2, window_bounds = array<i64: 1, 128>}, {pipeline_mode = #tpu.pipeline_mode<synchronous>, transform_indices = @transform_3, window_bounds = array<i64: 128, 128>}, {pipeline_mode = #tpu.pipeline_mode<synchronous>, transform_indices = @transform_4, window_bounds = array<i64: 1, 128>}, {pipeline_mode = #tpu.pipeline_mode<synchronous>, transform_indices = @transform_5, window_bounds = array<i64: 1, 128>}, {transform_indices = @transform_6, window_bounds = array<i64: 32, 128>}, {transform_indices = @transform_7, window_bounds = array<i64: 1, 2, 128>}]} {
    %c0 = arith.constant 0 : index
    %c0_0 = arith.constant 0 : index
    %0 = vector.load %arg2[%c0, %c0_0] : memref<32x48xbf16, #tpu.memory_space<vmem>>, vector<32x48xbf16>
    %c0_1 = arith.constant 0 : index
    %c0_2 = arith.constant 0 : index
    %1 = vector.load %arg3[%c0_1, %c0_2] : memref<48x128xbf16, #tpu.memory_space<vmem>>, vector<48x128xbf16>
    %cst = arith.constant dense<0.000000e+00> : vector<32x128xf32>
    %2 = tpu.matmul %0, %1, %cst {dimension_numbers = #tpu.dot_dimension_numbers<[1], [0], [0], [1], [0, 0, 1, 1], [], []>} : vector<32x48xbf16>, vector<48x128xbf16>, vector<32x128xf32> -> vector<32x128xf32>
    %c0_3 = arith.constant 0 : index
    %c0_4 = arith.constant 0 : index
    %3 = vector.load %arg4[%c0_3, %c0_4] : memref<1x128xf32, #tpu.memory_space<vmem>>, vector<1x128xf32>
    %4 = vector.broadcast %3 : vector<1x128xf32> to vector<32x128xf32>
    %5 = arith.addf %2, %4 : vector<32x128xf32>
    %cst_5 = arith.constant 0.000000e+00 : f32
    %6 = vector.broadcast %cst_5 : f32 to vector<32x128xf32>
    %7 = arith.maximumf %5, %6 : vector<32x128xf32>
    %8 = arith.truncf %7 : vector<32x128xf32> to vector<32x128xbf16>
    %c0_6 = arith.constant 0 : index
    %c0_7 = arith.constant 0 : index
    %9 = vector.load %arg5[%c0_6, %c0_7] : memref<128x128xbf16, #tpu.memory_space<vmem>>, vector<128x128xbf16>
    %cst_8 = arith.constant dense<0.000000e+00> : vector<32x128xf32>
    %10 = tpu.matmul %8, %9, %cst_8 {dimension_numbers = #tpu.dot_dimension_numbers<[1], [0], [0], [1], [0, 0, 1, 1], [], []>} : vector<32x128xbf16>, vector<128x128xbf16>, vector<32x128xf32> -> vector<32x128xf32>
    %c0_9 = arith.constant 0 : index
    %c0_10 = arith.constant 0 : index
    %11 = vector.load %arg8[%c0_9, %c0_10] : memref<32x128xf32, #tpu.memory_space<vmem>>, vector<32x128xf32>
    tpu.vector_store %arg8[%c0_9, %c0_10], %10 {strides = array<i32>} : memref<32x128xf32, #tpu.memory_space<vmem>>, vector<32x128xf32>,
    %c0_i32 = arith.constant 0 : i32
    %12 = arith.cmpi eq, %arg1, %c0_i32 : i32
    %13 = arith.extui %12 : i1 to i32
    %c0_i32_11 = arith.constant 0 : i32
    %14 = arith.cmpi ne, %13, %c0_i32_11 : i32
    scf.if %14 {
      %cst_23 = arith.constant 0.000000e+00 : f32
      %29 = vector.broadcast %cst_23 : f32 to vector<2x128xf32>
      %c0_24 = arith.constant 0 : index
      %c0_25 = arith.constant 0 : index
      %30 = vector.load %arg10[%c0_24, %c0_25] : memref<2x128xf32, #tpu.memory_space<vmem>>, vector<2x128xf32>
      tpu.vector_store %arg10[%c0_24, %c0_25], %29 {strides = array<i32>} : memref<2x128xf32, #tpu.memory_space<vmem>>, vector<2x128xf32>,
    } else {
    }
    %c0_12 = arith.constant 0 : index
    %c0_13 = arith.constant 0 : index
    %15 = vector.load %arg10[%c0_12, %c0_13] : memref<2x128xf32, #tpu.memory_space<vmem>>, vector<1x128xf32>
    %cst_14 = arith.constant dense<0.000000e+00> : vector<128xf32>
    %16 = vector.multi_reduction <add>, %10, %cst_14 [0] : vector<32x128xf32> to vector<128xf32>
    %17 = vector.shape_cast %16 : vector<128xf32> to vector<1x128xf32>
    %18 = arith.addf %15, %17 : vector<1x128xf32>
    %c0_15 = arith.constant 0 : index
    %c0_16 = arith.constant 0 : index
    %19 = vector.load %arg10[%c0_15, %c0_16] : memref<2x128xf32, #tpu.memory_space<vmem>>, vector<1x128xf32>
    tpu.vector_store %arg10[%c0_15, %c0_16], %18 {strides = array<i32>} : memref<2x128xf32, #tpu.memory_space<vmem>>, vector<1x128xf32>,
    %c1 = arith.constant 1 : index
    %c0_17 = arith.constant 0 : index
    %20 = vector.load %arg10[%c1, %c0_17] : memref<2x128xf32, #tpu.memory_space<vmem>>, vector<1x128xf32>
    %21 = arith.mulf %10, %10 : vector<32x128xf32>
    %cst_18 = arith.constant dense<0.000000e+00> : vector<128xf32>
    %22 = vector.multi_reduction <add>, %21, %cst_18 [0] : vector<32x128xf32> to vector<128xf32>
    %23 = vector.shape_cast %22 : vector<128xf32> to vector<1x128xf32>
    %24 = arith.addf %20, %23 : vector<1x128xf32>
    %c1_19 = arith.constant 1 : index
    %c0_20 = arith.constant 0 : index
    %25 = vector.load %arg10[%c1_19, %c0_20] : memref<2x128xf32, #tpu.memory_space<vmem>>, vector<1x128xf32>
    tpu.vector_store %arg10[%c1_19, %c0_20], %24 {strides = array<i32>} : memref<2x128xf32, #tpu.memory_space<vmem>>, vector<1x128xf32>,
    %c0_i32_21 = arith.constant 0 : i32
    %26 = arith.cmpi eq, %arg1, %c0_i32_21 : i32
    %27 = arith.extui %26 : i1 to i32
    %c0_i32_22 = arith.constant 0 : i32
    %28 = arith.cmpi ne, %27, %c0_i32_22 : i32
    scf.if %28 {
      %c0_23 = arith.constant 0 : index
      %c0_24 = arith.constant 0 : index
      %29 = vector.load %arg10[%c0_23, %c0_24] : memref<2x128xf32, #tpu.memory_space<vmem>>, vector<1x128xf32>
      %cst_25 = arith.constant 3.125000e-02 : f32
      %30 = vector.broadcast %cst_25 : f32 to vector<1x128xf32>
      %31 = arith.mulf %29, %30 : vector<1x128xf32>
      %c1_26 = arith.constant 1 : index
      %c0_27 = arith.constant 0 : index
      %32 = vector.load %arg10[%c1_26, %c0_27] : memref<2x128xf32, #tpu.memory_space<vmem>>, vector<1x128xf32>
      %cst_28 = arith.constant 3.125000e-02 : f32
      %33 = vector.broadcast %cst_28 : f32 to vector<1x128xf32>
      %34 = arith.mulf %32, %33 : vector<1x128xf32>
      %35 = arith.mulf %31, %31 : vector<1x128xf32>
      %36 = arith.subf %34, %35 : vector<1x128xf32>
      %c0_29 = arith.constant 0 : index
      %c0_30 = arith.constant 0 : index
      %37 = vector.load %arg6[%c0_29, %c0_30] : memref<1x128xf32, #tpu.memory_space<vmem>>, vector<1x128xf32>
      %cst_31 = arith.constant 9.99999974E-6 : f32
      %38 = vector.broadcast %cst_31 : f32 to vector<1x128xf32>
      %39 = arith.addf %36, %38 : vector<1x128xf32>
      %40 = math.rsqrt %39 : vector<1x128xf32>
      %41 = arith.mulf %37, %40 : vector<1x128xf32>
      %c0_32 = arith.constant 0 : index
      %c0_33 = arith.constant 0 : index
      %42 = vector.load %arg7[%c0_32, %c0_33] : memref<1x128xf32, #tpu.memory_space<vmem>>, vector<1x128xf32>
      %43 = arith.mulf %31, %41 : vector<1x128xf32>
      %44 = arith.subf %42, %43 : vector<1x128xf32>
      %45 = tpu.concatenate %41, %44 in 0 : vector<1x128xf32>, vector<1x128xf32> -> vector<2x128xf32>
      %46 = vector.shape_cast %45 : vector<2x128xf32> to vector<1x2x128xf32>
      %c0_34 = arith.constant 0 : index
      %c0_35 = arith.constant 0 : index
      %c0_36 = arith.constant 0 : index
      %47 = vector.load %arg9[%c0_34, %c0_35, %c0_36] : memref<1x2x128xf32, #tpu.memory_space<vmem>>, vector<1x2x128xf32>
      tpu.vector_store %arg9[%c0_34, %c0_35, %c0_36], %46 {strides = array<i32>} : memref<1x2x128xf32, #tpu.memory_space<vmem>>, vector<1x2x128xf32>,
    } else {
    }
    return
  }
  func.func @transform_0(%arg0: i32, %arg1: i32) -> (i32, i32) {
    %c1_i32 = arith.constant 1 : i32
    %0 = arith.muli %arg0, %c1_i32 : i32
    %1 = arith.addi %0, %arg1 : i32
    %c0_i32 = arith.constant 0 : i32
    %c0_i32_0 = arith.constant 0 : i32
    return %1, %c0_i32 : i32, i32
  }
  func.func @transform_1(%arg0: i32, %arg1: i32) -> (i32, i32) {
    %c0_i32 = arith.constant 0 : i32
    %c0_i32_0 = arith.constant 0 : i32
    %c0_i32_1 = arith.constant 0 : i32
    return %c0_i32, %c0_i32_0 : i32, i32
  }
  func.func @transform_2(%arg0: i32, %arg1: i32) -> (i32, i32) {
    %c0_i32 = arith.constant 0 : i32
    %c0_i32_0 = arith.constant 0 : i32
    %c0_i32_1 = arith.constant 0 : i32
    return %c0_i32, %c0_i32_0 : i32, i32
  }
  func.func @transform_3(%arg0: i32, %arg1: i32) -> (i32, i32) {
    %c0_i32 = arith.constant 0 : i32
    %c0_i32_0 = arith.constant 0 : i32
    %c0_i32_1 = arith.constant 0 : i32
    return %c0_i32, %c0_i32_0 : i32, i32
  }
  func.func @transform_4(%arg0: i32, %arg1: i32) -> (i32, i32) {
    %c0_i32 = arith.constant 0 : i32
    %c0_i32_0 = arith.constant 0 : i32
    %c0_i32_1 = arith.constant 0 : i32
    return %c0_i32, %c0_i32_0 : i32, i32
  }
  func.func @transform_5(%arg0: i32, %arg1: i32) -> (i32, i32) {
    %c0_i32 = arith.constant 0 : i32
    %c0_i32_0 = arith.constant 0 : i32
    %c0_i32_1 = arith.constant 0 : i32
    return %c0_i32, %c0_i32_0 : i32, i32
  }
  func.func @transform_6(%arg0: i32, %arg1: i32) -> (i32, i32) {
    %c1_i32 = arith.constant 1 : i32
    %0 = arith.muli %arg0, %c1_i32 : i32
    %1 = arith.addi %0, %arg1 : i32
    %c0_i32 = arith.constant 0 : i32
    %c0_i32_0 = arith.constant 0 : i32
    return %1, %c0_i32 : i32, i32
  }
  func.func @transform_7(%arg0: i32, %arg1: i32) -> (i32, i32, i32) {
    %c0_i32 = arith.constant 0 : i32
    %c0_i32_0 = arith.constant 0 : i32
    %c0_i32_1 = arith.constant 0 : i32
    return %arg0, %c0_i32, %c0_i32_0 : i32, i32, i32
  }
}

module attributes {stable_mosaic.version = 11 : i64} {
  func.func @_enc_pass2_kernel(%arg0: i32, %arg1: i32, %arg2: memref<32x128xf32, #tpu.memory_space<vmem>>, %arg3: memref<1x2x128xf32, #tpu.memory_space<vmem>>, %arg4: memref<128x256xbf16, #tpu.memory_space<vmem>>, %arg5: memref<1x256xf32, #tpu.memory_space<vmem>>, %arg6: memref<32x256xf32, #tpu.memory_space<vmem>>) attributes {dimension_semantics = [#tpu.dimension_semantics<parallel>, #tpu.dimension_semantics<parallel>], iteration_bounds = array<i64: 2, 1>, scalar_prefetch = 0 : i64, scratch_operands = 0 : i64, tpu.core_type = #tpu.core_type<tc>, window_params = [{transform_indices = @transform_0, window_bounds = array<i64: 32, 128>}, {transform_indices = @transform_1, window_bounds = array<i64: 1, 2, 128>}, {pipeline_mode = #tpu.pipeline_mode<synchronous>, transform_indices = @transform_2, window_bounds = array<i64: 128, 256>}, {pipeline_mode = #tpu.pipeline_mode<synchronous>, transform_indices = @transform_3, window_bounds = array<i64: 1, 256>}, {transform_indices = @transform_4, window_bounds = array<i64: 32, 256>}]} {
    %c0 = arith.constant 0 : index
    %c0_0 = arith.constant 0 : index
    %c0_1 = arith.constant 0 : index
    %0 = vector.load %arg3[%c0, %c0_0, %c0_1] : memref<1x2x128xf32, #tpu.memory_space<vmem>>, vector<1x2x128xf32>
    %1 = vector.extract_strided_slice %0 {offsets = [0, 0, 0], sizes = [1, 1, 128], strides = [1, 1, 1]} : vector<1x2x128xf32> to vector<1x1x128xf32>
    %2 = vector.shape_cast %1 : vector<1x1x128xf32> to vector<1x128xf32>
    %3 = vector.extract_strided_slice %0 {offsets = [0, 1, 0], sizes = [1, 1, 128], strides = [1, 1, 1]} : vector<1x2x128xf32> to vector<1x1x128xf32>
    %4 = vector.shape_cast %3 : vector<1x1x128xf32> to vector<1x128xf32>
    %c0_2 = arith.constant 0 : index
    %c0_3 = arith.constant 0 : index
    %5 = vector.load %arg2[%c0_2, %c0_3] : memref<32x128xf32, #tpu.memory_space<vmem>>, vector<32x128xf32>
    %6 = vector.broadcast %2 : vector<1x128xf32> to vector<32x128xf32>
    %7 = arith.mulf %5, %6 : vector<32x128xf32>
    %8 = vector.broadcast %4 : vector<1x128xf32> to vector<32x128xf32>
    %9 = arith.addf %7, %8 : vector<32x128xf32>
    %cst = arith.constant 0.000000e+00 : f32
    %10 = vector.broadcast %cst : f32 to vector<32x128xf32>
    %11 = arith.maximumf %9, %10 : vector<32x128xf32>
    %12 = arith.truncf %11 : vector<32x128xf32> to vector<32x128xbf16>
    %c0_4 = arith.constant 0 : index
    %c0_5 = arith.constant 0 : index
    %13 = vector.load %arg4[%c0_4, %c0_5] : memref<128x256xbf16, #tpu.memory_space<vmem>>, vector<128x256xbf16>
    %cst_6 = arith.constant dense<0.000000e+00> : vector<32x256xf32>
    %14 = tpu.matmul %12, %13, %cst_6 {dimension_numbers = #tpu.dot_dimension_numbers<[1], [0], [0], [1], [0, 0, 1, 1], [], []>} : vector<32x128xbf16>, vector<128x256xbf16>, vector<32x256xf32> -> vector<32x256xf32>
    %c0_7 = arith.constant 0 : index
    %c0_8 = arith.constant 0 : index
    %15 = vector.load %arg5[%c0_7, %c0_8] : memref<1x256xf32, #tpu.memory_space<vmem>>, vector<1x256xf32>
    %16 = vector.broadcast %15 : vector<1x256xf32> to vector<32x256xf32>
    %17 = arith.addf %14, %16 : vector<32x256xf32>
    %c0_9 = arith.constant 0 : index
    %c0_10 = arith.constant 0 : index
    %18 = vector.load %arg6[%c0_9, %c0_10] : memref<32x256xf32, #tpu.memory_space<vmem>>, vector<32x256xf32>
    tpu.vector_store %arg6[%c0_9, %c0_10], %17 {strides = array<i32>} : memref<32x256xf32, #tpu.memory_space<vmem>>, vector<32x256xf32>,
    return
  }
  func.func @transform_0(%arg0: i32, %arg1: i32) -> (i32, i32) {
    %c1_i32 = arith.constant 1 : i32
    %0 = arith.muli %arg0, %c1_i32 : i32
    %1 = arith.addi %0, %arg1 : i32
    %c0_i32 = arith.constant 0 : i32
    %c0_i32_0 = arith.constant 0 : i32
    return %1, %c0_i32 : i32, i32
  }
  func.func @transform_1(%arg0: i32, %arg1: i32) -> (i32, i32, i32) {
    %c0_i32 = arith.constant 0 : i32
    %c0_i32_0 = arith.constant 0 : i32
    %c0_i32_1 = arith.constant 0 : i32
    return %arg0, %c0_i32, %c0_i32_0 : i32, i32, i32
  }
  func.func @transform_2(%arg0: i32, %arg1: i32) -> (i32, i32) {
    %c0_i32 = arith.constant 0 : i32
    %c0_i32_0 = arith.constant 0 : i32
    %c0_i32_1 = arith.constant 0 : i32
    return %c0_i32, %c0_i32_0 : i32, i32
  }
  func.func @transform_3(%arg0: i32, %arg1: i32) -> (i32, i32) {
    %c0_i32 = arith.constant 0 : i32
    %c0_i32_0 = arith.constant 0 : i32
    %c0_i32_1 = arith.constant 0 : i32
    return %c0_i32, %c0_i32_0 : i32, i32
  }
  func.func @transform_4(%arg0: i32, %arg1: i32) -> (i32, i32) {
    %c1_i32 = arith.constant 1 : i32
    %0 = arith.muli %arg0, %c1_i32 : i32
    %1 = arith.addi %0, %arg1 : i32
    %c0_i32 = arith.constant 0 : i32
    %c0_i32_0 = arith.constant 0 : i32
    return %1, %c0_i32 : i32, i32
  }
}

module attributes {stable_mosaic.version = 11 : i64} {
  func.func @_ppm_prep_kernel(%arg0: i32, %arg1: memref<64x256xf32, #tpu.memory_space<vmem>>, %arg2: memref<256x256xbf16, #tpu.memory_space<vmem>>, %arg3: memref<1x256xf32, #tpu.memory_space<vmem>>, %arg4: memref<64x256xbf16, #tpu.memory_space<vmem>>, %arg5: memref<64x256xbf16, #tpu.memory_space<vmem>>) attributes {dimension_semantics = [#tpu.dimension_semantics<parallel>], iteration_bounds = array<i64: 1>, scalar_prefetch = 0 : i64, scratch_operands = 0 : i64, tpu.core_type = #tpu.core_type<tc>, window_params = [{transform_indices = @transform_0, window_bounds = array<i64: 64, 256>}, {pipeline_mode = #tpu.pipeline_mode<synchronous>, transform_indices = @transform_1, window_bounds = array<i64: 256, 256>}, {pipeline_mode = #tpu.pipeline_mode<synchronous>, transform_indices = @transform_2, window_bounds = array<i64: 1, 256>}, {transform_indices = @transform_3, window_bounds = array<i64: 64, 256>}, {transform_indices = @transform_4, window_bounds = array<i64: 64, 256>}]} {
    %c0 = arith.constant 0 : index
    %c0_0 = arith.constant 0 : index
    %0 = vector.load %arg1[%c0, %c0_0] : memref<64x256xf32, #tpu.memory_space<vmem>>, vector<64x256xf32>
    %1 = arith.mulf %0, %0 : vector<64x256xf32>
    %cst = arith.constant dense<0.000000e+00> : vector<64xf32>
    %2 = vector.multi_reduction <add>, %1, %cst [1] : vector<64x256xf32> to vector<64xf32>
    %3 = vector.shape_cast %2 : vector<64xf32> to vector<64x1xf32>
    %cst_1 = arith.constant 1.000000e-16 : f32
    %4 = vector.broadcast %cst_1 : f32 to vector<64x1xf32>
    %5 = arith.maximumf %3, %4 : vector<64x1xf32>
    %6 = math.rsqrt %5 : vector<64x1xf32>
    %7 = vector.broadcast %6 : vector<64x1xf32> to vector<64x256xf32>
    %8 = arith.mulf %0, %7 : vector<64x256xf32>
    %9 = arith.truncf %8 : vector<64x256xf32> to vector<64x256xbf16>
    %c0_2 = arith.constant 0 : index
    %c0_3 = arith.constant 0 : index
    %10 = vector.load %arg4[%c0_2, %c0_3] : memref<64x256xbf16, #tpu.memory_space<vmem>>, vector<64x256xbf16>
    tpu.vector_store %arg4[%c0_2, %c0_3], %9 {strides = array<i32>} : memref<64x256xbf16, #tpu.memory_space<vmem>>, vector<64x256xbf16>,
    %11 = arith.truncf %0 : vector<64x256xf32> to vector<64x256xbf16>
    %c0_4 = arith.constant 0 : index
    %c0_5 = arith.constant 0 : index
    %12 = vector.load %arg2[%c0_4, %c0_5] : memref<256x256xbf16, #tpu.memory_space<vmem>>, vector<256x256xbf16>
    %cst_6 = arith.constant dense<0.000000e+00> : vector<64x256xf32>
    %13 = tpu.matmul %11, %12, %cst_6 {dimension_numbers = #tpu.dot_dimension_numbers<[1], [0], [0], [1], [0, 0, 1, 1], [], []>} : vector<64x256xbf16>, vector<256x256xbf16>, vector<64x256xf32> -> vector<64x256xf32>
    %c0_7 = arith.constant 0 : index
    %c0_8 = arith.constant 0 : index
    %14 = vector.load %arg3[%c0_7, %c0_8] : memref<1x256xf32, #tpu.memory_space<vmem>>, vector<1x256xf32>
    %15 = vector.broadcast %14 : vector<1x256xf32> to vector<64x256xf32>
    %16 = arith.addf %13, %15 : vector<64x256xf32>
    %17 = arith.truncf %16 : vector<64x256xf32> to vector<64x256xbf16>
    %c0_9 = arith.constant 0 : index
    %c0_10 = arith.constant 0 : index
    %18 = vector.load %arg5[%c0_9, %c0_10] : memref<64x256xbf16, #tpu.memory_space<vmem>>, vector<64x256xbf16>
    tpu.vector_store %arg5[%c0_9, %c0_10], %17 {strides = array<i32>} : memref<64x256xbf16, #tpu.memory_space<vmem>>, vector<64x256xbf16>,
    return
  }
  func.func @transform_0(%arg0: i32) -> (i32, i32) {
    %c0_i32 = arith.constant 0 : i32
    %c0_i32_0 = arith.constant 0 : i32
    return %arg0, %c0_i32 : i32, i32
  }
  func.func @transform_1(%arg0: i32) -> (i32, i32) {
    %c0_i32 = arith.constant 0 : i32
    %c0_i32_0 = arith.constant 0 : i32
    %c0_i32_1 = arith.constant 0 : i32
    return %c0_i32, %c0_i32_0 : i32, i32
  }
  func.func @transform_2(%arg0: i32) -> (i32, i32) {
    %c0_i32 = arith.constant 0 : i32
    %c0_i32_0 = arith.constant 0 : i32
    %c0_i32_1 = arith.constant 0 : i32
    return %c0_i32, %c0_i32_0 : i32, i32
  }
  func.func @transform_3(%arg0: i32) -> (i32, i32) {
    %c0_i32 = arith.constant 0 : i32
    %c0_i32_0 = arith.constant 0 : i32
    return %arg0, %c0_i32 : i32, i32
  }
  func.func @transform_4(%arg0: i32) -> (i32, i32) {
    %c0_i32 = arith.constant 0 : i32
    %c0_i32_0 = arith.constant 0 : i32
    return %arg0, %c0_i32 : i32, i32
  }
}

module attributes {stable_mosaic.version = 11 : i64} {
  func.func @_ppm_sim_kernel(%arg0: i32, %arg1: i32, %arg2: memref<1x16x256xbf16, #tpu.memory_space<vmem>>, %arg3: memref<1x16x256xbf16, #tpu.memory_space<vmem>>, %arg4: memref<1x16x256xbf16, #tpu.memory_space<vmem>>, %arg5: memref<1x16x256xf32, #tpu.memory_space<vmem>>) attributes {dimension_semantics = [#tpu.dimension_semantics<parallel>, #tpu.dimension_semantics<parallel>], iteration_bounds = array<i64: 4, 1>, scalar_prefetch = 0 : i64, scratch_operands = 0 : i64, tpu.core_type = #tpu.core_type<tc>, window_params = [{transform_indices = @transform_0, window_bounds = array<i64: 1, 16, 256>}, {transform_indices = @transform_1, window_bounds = array<i64: 1, 16, 256>}, {transform_indices = @transform_2, window_bounds = array<i64: 1, 16, 256>}, {transform_indices = @transform_3, window_bounds = array<i64: 1, 16, 256>}]} {
    %c0 = arith.constant 0 : index
    %c0_0 = arith.constant 0 : index
    %c0_1 = arith.constant 0 : index
    %0 = vector.load %arg2[%c0, %c0_0, %c0_1] : memref<1x16x256xbf16, #tpu.memory_space<vmem>>, vector<1x16x256xbf16>
    %c0_2 = arith.constant 0 : index
    %c0_3 = arith.constant 0 : index
    %c0_4 = arith.constant 0 : index
    %1 = vector.load %arg3[%c0_2, %c0_3, %c0_4] : memref<1x16x256xbf16, #tpu.memory_space<vmem>>, vector<1x16x256xbf16>
    "tpu.trace_start"() <{level = 10 : i32, message = "bqc,bkc->bqk"}> : () -> ()
    %cst = arith.constant dense<0.000000e+00> : vector<1x16x16xf32>
    %2 = tpu.matmul %0, %1, %cst {dimension_numbers = #tpu.dot_dimension_numbers<[2], [2], [1], [1], [0, 0, 0, 1, 1, 1], [0], [0]>} : vector<1x16x256xbf16>, vector<1x16x256xbf16>, vector<1x16x16xf32> -> vector<1x16x16xf32>
    "tpu.trace_stop"() : () -> ()
    %cst_5 = arith.constant 0.000000e+00 : f32
    %3 = vector.broadcast %cst_5 : f32 to vector<1x16x16xf32>
    %4 = arith.maximumf %2, %3 : vector<1x16x16xf32>
    %5 = arith.mulf %4, %4 : vector<1x16x16xf32>
    %6 = arith.truncf %5 : vector<1x16x16xf32> to vector<1x16x16xbf16>
    %c0_6 = arith.constant 0 : index
    %c0_7 = arith.constant 0 : index
    %c0_8 = arith.constant 0 : index
    %7 = vector.load %arg4[%c0_6, %c0_7, %c0_8] : memref<1x16x256xbf16, #tpu.memory_space<vmem>>, vector<1x16x256xbf16>
    "tpu.trace_start"() <{level = 10 : i32, message = "bqk,bkc->bqc"}> : () -> ()
    %cst_9 = arith.constant dense<0.000000e+00> : vector<1x16x256xf32>
    %8 = tpu.matmul %6, %7, %cst_9 {dimension_numbers = #tpu.dot_dimension_numbers<[2], [1], [1], [2], [0, 0, 0, 1, 1, 2], [0], [0]>} : vector<1x16x16xbf16>, vector<1x16x256xbf16>, vector<1x16x256xf32> -> vector<1x16x256xf32>
    "tpu.trace_stop"() : () -> ()
    %c0_10 = arith.constant 0 : index
    %c0_11 = arith.constant 0 : index
    %c0_12 = arith.constant 0 : index
    %9 = vector.load %arg5[%c0_10, %c0_11, %c0_12] : memref<1x16x256xf32, #tpu.memory_space<vmem>>, vector<1x16x256xf32>
    tpu.vector_store %arg5[%c0_10, %c0_11, %c0_12], %8 {strides = array<i32>} : memref<1x16x256xf32, #tpu.memory_space<vmem>>, vector<1x16x256xf32>,
    return
  }
  func.func @transform_0(%arg0: i32, %arg1: i32) -> (i32, i32, i32) {
    %c0_i32 = arith.constant 0 : i32
    %c0_i32_0 = arith.constant 0 : i32
    return %arg0, %arg1, %c0_i32 : i32, i32, i32
  }
  func.func @transform_1(%arg0: i32, %arg1: i32) -> (i32, i32, i32) {
    %c0_i32 = arith.constant 0 : i32
    %c0_i32_0 = arith.constant 0 : i32
    %c0_i32_1 = arith.constant 0 : i32
    return %arg0, %c0_i32, %c0_i32_0 : i32, i32, i32
  }
  func.func @transform_2(%arg0: i32, %arg1: i32) -> (i32, i32, i32) {
    %c0_i32 = arith.constant 0 : i32
    %c0_i32_0 = arith.constant 0 : i32
    %c0_i32_1 = arith.constant 0 : i32
    return %arg0, %c0_i32, %c0_i32_0 : i32, i32, i32
  }
  func.func @transform_3(%arg0: i32, %arg1: i32) -> (i32, i32, i32) {
    %c0_i32 = arith.constant 0 : i32
    %c0_i32_0 = arith.constant 0 : i32
    return %arg0, %arg1, %c0_i32 : i32, i32, i32
  }
}

</mosaic_0001>

<llo_original>
// kernel: pixpro_forward.6
$region0: #{pixpro_forward.6}
  #allocation0 [shape = 'u32[]', space=smem, size = 0x4, offset = 0x4, fixed_abs, tag = 'smem constant byte address 0x4 - core index']
  #allocation1 [shape = 'u32[144,128]{1,0:T(1,128)}', space=vmem, size = 0x12000, scoped, tag = 'internal scratch']
  #allocation2 [shape = 'f32[2,128]{1,0:T(2,128)}', space=vmem, size = 0x400, scoped, tag = 'scratch operand']
  %s0 = inlined_call_operand.vmem [shape: bf16[64,48], index: 0, kind: input, shape index: {}]
  %s1 = inlined_call_operand.vmem [shape: bf16[48,128], index: 1, kind: input, shape index: {}]
  %s2 = inlined_call_operand.vmem [shape: f32[1,128], index: 2, kind: input, shape index: {}]
  %s3 = inlined_call_operand.vmem [shape: bf16[128,128], index: 3, kind: input, shape index: {}]
  %s4 = inlined_call_operand.vmem [shape: f32[1,128], index: 4, kind: input, shape index: {}]
  %s5 = inlined_call_operand.vmem [shape: f32[1,128], index: 5, kind: input, shape index: {}]
  %s6 = inlined_call_operand.vmem [shape: f32[64,128], index: 6, kind: output, shape index: {0}]
  %s7 = inlined_call_operand.vmem [shape: f32[2,2,128], index: 7, kind: output, shape index: {1}]
  %8 = xla_tuple %s6, %s7
  %s9 = sld [smem:[#allocation0]]
  $region73: #{pixpro_forward.6} parent=0
    _
  %s11 = ssub.s32 1, %s9
  %s12 = scalar_select 0, %s11, %s9
  loop: start=0, step=1, limit=4
  $region2: #{pixpro_forward.6} parent=0 // loop_pre_header
    _
  $region3: #{pixpro_forward.6} parent=0 // loop_header
    %s14 = sphi 0, %s18
    %p15 = scmp.ge.s32.totalorder %s14, 4
    %s21 = sphi 0, %s33
    %s22 = sphi 0, %s29
    %s23 = sphi 0, %s21
    %s24 = sphi 0, %s22
    %s25 = sphi 0, %s23
    %s26 = sphi 0, %s24
    %s38 = sphi 0, %s40
    %s41 = sphi 0, %s38
    %s42 = sphi 0, %s41
    %s58 = sphi 0, %s42
    %s62 = sphi 0, %s62
    %s64 = sphi 0, %s62
    %s65 = sphi 0, %s64
    %s79 = sphi 0, %s65
    %s83 = sphi 0, %s83
    %s85 = sphi 0, %s83
    %s86 = sphi 0, %s85
    %s100 = sphi 0, %s86
    %s104 = sphi 0, %s104
    %s106 = sphi 0, %s104
    %s107 = sphi 0, %s106
    %s121 = sphi 0, %s107
    %s125 = sphi 0, %s125
    %s127 = sphi 0, %s125
    %s128 = sphi 0, %s127
    %s142 = sphi 0, %s128
    %s146 = sphi 0, %s146
    %s148 = sphi 0, %s146
    %s149 = sphi 0, %s148
    %s163 = sphi 0, %s149
    %s171 = sphi 0, %s173
    %s174 = sphi 0, %s171
    %s175 = sphi 0, %s174
    %s191 = sphi 0, %s175
    %s197 = sphi 0, %s199
    %s200 = sphi 0, %s197
    %s201 = sphi 0, %s200
    %s217 = sphi 0, %s201
  $region4: #{pixpro_forward.6} parent=0 // loop_header_branch
    %17 = sbr.rel (%p15) target = $region8
  $region5: #{pixpro_forward.6} parent=0 // loop_body
    %s19 = ssub.s32 %s14, 1
    %s20 = ssub.s32 %s14, 2
    %s27 = sadd.s32 1, %s22
    %p28 = scmp.ge.s32.totalorder %s27, 1
    %s29 = scalar_select %p28, 0, %s27
    %s30 = sadd.s32 1, %s21
    %s31 = scalar_select %p28, %s30, %s21
    %p32 = scmp.ge.s32.totalorder %s31, 2
    %s33 = scalar_select %p32, 0, %s31
    %s34 = sadd.s32 %s21, %s22
    %s35 = sadd.s32 %s33, %s29
    %s36 = ssub.s32 %s34, %s35
    %p37 = scmp.eq.s32.totalorder %s36, 0
    %s39 = sadd.s32 %s38, 1
    %s40 = scalar_select %p37, %s38, %s39
    %p43 = pneg %p37
    %p44 = scmp.eq.s32.totalorder %s14, 1
    %p45 = por %p43, %p44
    %p46 = scmp.ne.s32.totalorder %s38, %s41
    %p47 = scmp.eq.s32.totalorder %s14, 0
    %p48 = por %p46, %p47
    %p49 = scmp.ne.s32.totalorder %s38, %s41
    %p50 = scmp.eq.s32.totalorder %s19, 1
    %p51 = por %p49, %p50
    %p52 = scmp.ne.s32.totalorder %s41, %s42
    %p53 = scmp.eq.s32.totalorder %s19, 0
    %p54 = por %p52, %p53
    %p55 = scmp.ne.s32.totalorder %s41, %s42
    %p56 = scmp.eq.s32.totalorder %s20, 1
    %p57 = por %p55, %p56
    %p59 = scmp.ne.s32.totalorder %s42, %s58
    %p60 = scmp.eq.s32.totalorder %s20, 0
    %p61 = por %p59, %p60
    %s63 = sadd.s32 %s62, 1
    %p66 = scmp.eq.s32.totalorder %s14, 1
    %p67 = scmp.ne.s32.totalorder %s62, %s64
    %p68 = scmp.eq.s32.totalorder %s14, 0
    %p69 = por %p67, %p68
    %p70 = scmp.ne.s32.totalorder %s62, %s64
    %p71 = scmp.eq.s32.totalorder %s19, 1
    %p72 = por %p70, %p71
    %p73 = scmp.ne.s32.totalorder %s64, %s65
    %p74 = scmp.eq.s32.totalorder %s19, 0
    %p75 = por %p73, %p74
    %p76 = scmp.ne.s32.totalorder %s64, %s65
    %p77 = scmp.eq.s32.totalorder %s20, 1
    %p78 = por %p76, %p77
    %p80 = scmp.ne.s32.totalorder %s65, %s79
    %p81 = scmp.eq.s32.totalorder %s20, 0
    %p82 = por %p80, %p81
    %s84 = sadd.s32 %s83, 1
    %p87 = scmp.eq.s32.totalorder %s14, 1
    %p88 = scmp.ne.s32.totalorder %s83, %s85
    %p89 = scmp.eq.s32.totalorder %s14, 0
    %p90 = por %p88, %p89
    %p91 = scmp.ne.s32.totalorder %s83, %s85
    %p92 = scmp.eq.s32.totalorder %s19, 1
    %p93 = por %p91, %p92
    %p94 = scmp.ne.s32.totalorder %s85, %s86
    %p95 = scmp.eq.s32.totalorder %s19, 0
    %p96 = por %p94, %p95
    %p97 = scmp.ne.s32.totalorder %s85, %s86
    %p98 = scmp.eq.s32.totalorder %s20, 1
    %p99 = por %p97, %p98
    %p101 = scmp.ne.s32.totalorder %s86, %s100
    %p102 = scmp.eq.s32.totalorder %s20, 0
    %p103 = por %p101, %p102
    %s105 = sadd.s32 %s104, 1
    %p108 = scmp.eq.s32.totalorder %s14, 1
    %p109 = scmp.ne.s32.totalorder %s104, %s106
    %p110 = scmp.eq.s32.totalorder %s14, 0
    %p111 = por %p109, %p110
    %p112 = scmp.ne.s32.totalorder %s104, %s106
    %p113 = scmp.eq.s32.totalorder %s19, 1
    %p114 = por %p112, %p113
    %p115 = scmp.ne.s32.totalorder %s106, %s107
    %p116 = scmp.eq.s32.totalorder %s19, 0
    %p117 = por %p115, %p116
    %p118 = scmp.ne.s32.totalorder %s106, %s107
    %p119 = scmp.eq.s32.totalorder %s20, 1
    %p120 = por %p118, %p119
    %p122 = scmp.ne.s32.totalorder %s107, %s121
    %p123 = scmp.eq.s32.totalorder %s20, 0
    %p124 = por %p122, %p123
    %s126 = sadd.s32 %s125, 1
    %p129 = scmp.eq.s32.totalorder %s14, 1
    %p130 = scmp.ne.s32.totalorder %s125, %s127
    %p131 = scmp.eq.s32.totalorder %s14, 0
    %p132 = por %p130, %p131
    %p133 = scmp.ne.s32.totalorder %s125, %s127
    %p134 = scmp.eq.s32.totalorder %s19, 1
    %p135 = por %p133, %p134
    %p136 = scmp.ne.s32.totalorder %s127, %s128
    %p137 = scmp.eq.s32.totalorder %s19, 0
    %p138 = por %p136, %p137
    %p139 = scmp.ne.s32.totalorder %s127, %s128
    %p140 = scmp.eq.s32.totalorder %s20, 1
    %p141 = por %p139, %p140
    %p143 = scmp.ne.s32.totalorder %s128, %s142
    %p144 = scmp.eq.s32.totalorder %s20, 0
    %p145 = por %p143, %p144
    %s147 = sadd.s32 %s146, 1
    %p150 = scmp.eq.s32.totalorder %s14, 1
    %p151 = scmp.ne.s32.totalorder %s146, %s148
    %p152 = scmp.eq.s32.totalorder %s14, 0
    %p153 = por %p151, %p152
    %p154 = scmp.ne.s32.totalorder %s146, %s148
    %p155 = scmp.eq.s32.totalorder %s19, 1
    %p156 = por %p154, %p155
    %p157 = scmp.ne.s32.totalorder %s148, %s149
    %p158 = scmp.eq.s32.totalorder %s19, 0
    %p159 = por %p157, %p158
    %p160 = scmp.ne.s32.totalorder %s148, %s149
    %p161 = scmp.eq.s32.totalorder %s20, 1
    %p162 = por %p160, %p161
    %p164 = scmp.ne.s32.totalorder %s149, %s163
    %p165 = scmp.eq.s32.totalorder %s20, 0
    %p166 = por %p164, %p165
    %s167 = sadd.s32 %s21, %s22
    %s168 = sadd.s32 %s33, %s29
    %s169 = ssub.s32 %s167, %s168
    %p170 = scmp.eq.s32.totalorder %s169, 0
    %s172 = sadd.s32 %s171, 1
    %s173 = scalar_select %p170, %s171, %s172
    %p176 = pneg %p170
    %p177 = scmp.eq.s32.totalorder %s14, 1
    %p178 = por %p176, %p177
    %p179 = scmp.ne.s32.totalorder %s171, %s174
    %p180 = scmp.eq.s32.totalorder %s14, 0
    %p181 = por %p179, %p180
    %p182 = scmp.ne.s32.totalorder %s171, %s174
    %p183 = scmp.eq.s32.totalorder %s19, 1
    %p184 = por %p182, %p183
    %p185 = scmp.ne.s32.totalorder %s174, %s175
    %p186 = scmp.eq.s32.totalorder %s19, 0
    %p187 = por %p185, %p186
    %p188 = scmp.ne.s32.totalorder %s174, %s175
    %p189 = scmp.eq.s32.totalorder %s20, 1
    %p190 = por %p188, %p189
    %p192 = scmp.ne.s32.totalorder %s175, %s191
    %p193 = scmp.eq.s32.totalorder %s20, 0
    %p194 = por %p192, %p193
    %s195 = ssub.s32 %s21, %s33
    %p196 = scmp.eq.s32.totalorder %s195, 0
    %s198 = sadd.s32 %s197, 1
    %s199 = scalar_select %p196, %s197, %s198
    %p202 = pneg %p196
    %p203 = scmp.eq.s32.totalorder %s14, 1
    %p204 = por %p202, %p203
    %p205 = scmp.ne.s32.totalorder %s197, %s200
    %p206 = scmp.eq.s32.totalorder %s14, 0
    %p207 = por %p205, %p206
    %p208 = scmp.ne.s32.totalorder %s197, %s200
    %p209 = scmp.eq.s32.totalorder %s19, 1
    %p210 = por %p208, %p209
    %p211 = scmp.ne.s32.totalorder %s200, %s201
    %p212 = scmp.eq.s32.totalorder %s19, 0
    %p213 = por %p211, %p212
    %p214 = scmp.ne.s32.totalorder %s200, %s201
    %p215 = scmp.eq.s32.totalorder %s20, 1
    %p216 = por %p214, %p215
    %p218 = scmp.ne.s32.totalorder %s201, %s217
    %p219 = scmp.eq.s32.totalorder %s20, 0
    %p220 = por %p218, %p219
    %p221 = scmp.le.s32.totalorder 1, %s14
    %p222 = scmp.lt.s32.totalorder %s14, 3
    %p223 = pnand %p221, %p222
    %p224 = pneg %p223
    // Predicated region
    $region9: #{pixpro_forward.6} parent=5 // pred_check
      _
    $region10: #{pixpro_forward.6} parent=5 // pred_check_branch
      %226 = sbr.rel (%p223) target = $region12
    $region11: #{pixpro_forward.6} parent=5 // pred_region
      %s227 = ssub.s32 %s14, 1
      // Predicated region
      $region13: #{pixpro_forward.6} parent=11 // pred_check
        %p228 = pneg %p75
      $region14: #{pixpro_forward.6} parent=11 // pred_check_branch
        %230 = sbr.rel (%p228) target = $region16
      $region15: #{pixpro_forward.6} parent=11 // pred_region
        _
      $region16: #{pixpro_forward.6} parent=11 // pred_fallthru
        _
      // Predicated region
      $region17: #{pixpro_forward.6} parent=11 // pred_check
        %p231 = pneg %p96
      $region18: #{pixpro_forward.6} parent=11 // pred_check_branch
        %233 = sbr.rel (%p231) target = $region20
      $region19: #{pixpro_forward.6} parent=11 // pred_region
        _
      $region20: #{pixpro_forward.6} parent=11 // pred_fallthru
        _
      // Predicated region
      $region21: #{pixpro_forward.6} parent=11 // pred_check
        %p234 = pneg %p117
      $region22: #{pixpro_forward.6} parent=11 // pred_check_branch
        %236 = sbr.rel (%p234) target = $region24
      $region23: #{pixpro_forward.6} parent=11 // pred_region
        _
      $region24: #{pixpro_forward.6} parent=11 // pred_fallthru
        _
      // Predicated region
      $region25: #{pixpro_forward.6} parent=11 // pred_check
        %p237 = pneg %p138
      $region26: #{pixpro_forward.6} parent=11 // pred_check_branch
        %239 = sbr.rel (%p237) target = $region28
      $region27: #{pixpro_forward.6} parent=11 // pred_region
        _
      $region28: #{pixpro_forward.6} parent=11 // pred_fallthru
        _
      // Predicated region
      $region29: #{pixpro_forward.6} parent=11 // pred_check
        %p240 = pneg %p159
      $region30: #{pixpro_forward.6} parent=11 // pred_check_branch
        %242 = sbr.rel (%p240) target = $region32
      $region31: #{pixpro_forward.6} parent=11 // pred_region
        _
      $region32: #{pixpro_forward.6} parent=11 // pred_fallthru
        _
    $region12: #{pixpro_forward.6} parent=5 // pred_fallthru
      _
    %p243 = scmp.lt.s32.totalorder %s14, 2
    // Predicated region
    $region33: #{pixpro_forward.6} parent=5 // pred_check
      %p244 = pneg %p243
    $region34: #{pixpro_forward.6} parent=5 // pred_check_branch
      %246 = sbr.rel (%p244) target = $region36
    $region35: #{pixpro_forward.6} parent=5 // pred_region
      // Predicated region
      $region37: #{pixpro_forward.6} parent=35 // pred_check
        %p247 = pneg %p48
      $region38: #{pixpro_forward.6} parent=35 // pred_check_branch
        %249 = sbr.rel (%p247) target = $region40
      $region39: #{pixpro_forward.6} parent=35 // pred_region
        %s250 = sadd.s32 %s21, %s22
        %s251 = smul.u32 4, %s250
        %p252 = scmp.lt.s32.totalorder %s251, 7
        %s253 = scalar_select %p252, %s251, 7
        %s254 = smul.addr %s253, 4
        %s255 = scalar_lea.vmem %s0, %s254
        %s256 = sadd.s32 %s21, %s22
        %s257 = smul.u32 4, %s256
      $region40: #{pixpro_forward.6} parent=35 // pred_fallthru
        _
    $region36: #{pixpro_forward.6} parent=5 // pred_fallthru
      _
    %p258 = scmp.le.s32.totalorder 1, %s14
    %p259 = scmp.lt.s32.totalorder %s14, 3
    %p260 = pnand %p258, %p259
    %p261 = pneg %p260
    // Predicated region
    $region41: #{pixpro_forward.6} parent=5 // pred_check
      _
    $region42: #{pixpro_forward.6} parent=5 // pred_check_branch
      %263 = sbr.rel (%p260) target = $region44
    $region43: #{pixpro_forward.6} parent=5 // pred_region
      %s264 = ssub.s32 %s14, 1
      %s265 = sadd.s32 %s23, %s24
      %s266 = smul.u32 4, %s265
      %p267 = scmp.lt.s32.totalorder %s266, 7
      %s268 = scalar_select %p267, %s266, 7
      %s269 = smul.addr %s268, 4
      %s270 = scalar_lea.vmem %s0, %s269
      %p271 = pneg %p54
      %p272 = pneg %p51
      %p273 = pneg %p75
      %p274 = pneg %p72
      %p275 = pneg %p96
      %p276 = pneg %p93
      %p277 = pneg %p117
      %p278 = pneg %p114
      %p279 = pneg %p138
      %p280 = pneg %p135
      %p281 = pneg %p159
      %p282 = pneg %p156
      %p283 = pneg %p187
      %p284 = pneg %p184
      %s285 = sadd.s32 %s23, %s24
      %s286 = smul.u32 4, %s285
      %p287 = scmp.lt.s32.totalorder %s286, 7
      %s288 = scalar_select %p287, %s286, 7
      %s289 = smul.addr %s288, 8
      %s290 = scalar_lea.vmem %s6, %s289
      %p291 = pneg %p213
      %p292 = pneg %p210
      %p293 = scmp.lt.s32.totalorder %s23, 1
      %s294 = scalar_select %p293, %s23, 1
      %s295 = smul.addr %s294, 2
      %s296 = scalar_lea.vmem %s7, %s295
      %s297 = sadd.s32 %s23, %s24
      %s298 = smul.u32 4, %s297
      %p299 = scmp.lt.s32.totalorder %s298, 7
      %s300 = scalar_select %p299, %s298, 7
      %s301 = smul.addr %s300, 4
      %s302 = scalar_lea.vmem %s0, %s301
      %s303 = sadd.s32 %s23, %s24
      %s304 = smul.u32 4, %s303
      %s305 = sadd.s32 %s23, %s24
      %s306 = smul.u32 4, %s305
      %p307 = scmp.lt.s32.totalorder %s306, 7
      %s308 = scalar_select %p307, %s306, 7
      %s309 = smul.addr %s308, 8
      %s310 = scalar_lea.vmem %s6, %s309
      %s311 = sadd.s32 %s23, %s24
      %s312 = smul.u32 4, %s311
      %p313 = scmp.lt.s32.totalorder %s23, 1
      %s314 = scalar_select %p313, %s23, 1
      %s315 = smul.addr %s314, 2
      %s316 = scalar_lea.vmem %s7, %s315
      %v318 = vld [vmem:[%s302] sm:$0xf]
      %v319 = vld [vmem:[%s302 + $0x4] sm:$0xf]
      %v320 = vld [vmem:[%s302 + $0x8] sm:$0xf]
      %v321 = vld [vmem:[%s302 + $0xc] sm:$0xf]
      %v322 = vld [vmem:[%s1] sm:$0xf]
      %v323 = vld [vmem:[%s1 + $0x4] sm:$0xf]
      %v324 = vld [vmem:[%s1 + $0x8] sm:$0xf]
      %v325 = vld [vmem:[%s1 + $0xc] sm:$0xf]
      %v326 = vld [vmem:[%s1 + $0x10] sm:$0xf]
      %v327 = vld [vmem:[%s1 + $0x14] sm:$0xf]
      %v328 = vld [vmem:[%s2] sm:$0x1]
      %v330 = vlaneseq
      %v331 = vshrl.u32 %v330, 7
      %v332 = vsub.s32 0, %v331
      %v333 = vrot.slane %v328, %v332
      %v339 = vunpack.c.l.b16 %v318
      %v340 = vunpack.c.l.b16 %v319
      %v341 = vunpack.c.l.b16 %v320
      %v342 = vunpack.c.l.b16 %v321
      %v343 = vpack.c.b16 %v340, %v339
      %v344 = vpack.c.b16 %v342, %v341
      %v351 = vunpack.c.l.b16 %v322
      %v352 = vunpack.c.l.b16 %v323
      %v353 = vunpack.c.l.b16 %v324
      %v354 = vunpack.c.l.b16 %v325
      %v355 = vunpack.c.l.b16 %v326
      %v356 = vunpack.c.l.b16 %v327
      %v357 = vpack.c.b16 %v352, %v351
      %v358 = vpack.c.b16 %v354, %v353
      %v359 = vpack.c.b16 %v356, %v355
      %vm363 = vcmask 392192
      %v365 = vsel %vm363, %v343, 0
      %v368 = vsel %vm363, %v344, 0
      %370 = vmatprep.subr.bf16.mxu0 0
      %371 = vmatpush1.bf16.msra.mxu0 %v357
      %372 = vmatprep.subr.bf16.mxu0 0
      %373 = vmatpush1.bf16.msra.mxu0 %v358
      %374 = vmatprep.subr.bf16.mxu0 0
      %375 = vmatpush1.bf16.msra.mxu0 %v359
      %376 = vmatprep.subr.bf16.mxu0 0
      %377 = vmatpush1.bf16.msra.mxu0 0
      %378 = vmatprep.subr.bf16.mxu0 0
      %379 = vmatpush1.bf16.msra.mxu0 0
      %380 = vmatprep.subr.bf16.mxu0 0
      %381 = vmatpush1.bf16.msra.mxu0 0
      %382 = vmatprep.subr.bf16.mxu0 0
      %383 = vmatpush1.bf16.msra.mxu0 0
      %384 = vmatprep.subr.bf16.mxu0 0
      %385 = vmatpush1.bf16.msra.mxu0 0
      %386 = vmatprep.subr.bf16.mxu0 0
      %387 = vmatpush1.bf16.msra.mxu0 0
      %388 = vmatprep.subr.bf16.mxu0 0
      %389 = vmatpush1.bf16.msra.mxu0 0
      %390 = vmatprep.subr.bf16.mxu0 0
      %391 = vmatpush1.bf16.msra.mxu0 0
      %392 = vmatprep.subr.bf16.mxu0 0
      %393 = vmatpush1.bf16.msra.mxu0 0
      %394 = vmatprep.subr.bf16.mxu0 0
      %395 = vmatpush1.bf16.msra.mxu0 0
      %396 = vmatprep.subr.bf16.mxu0 0
      %397 = vmatpush1.bf16.msra.mxu0 0
      %398 = vmatprep.subr.bf16.mxu0 0
      %399 = vmatpush1.bf16.msra.mxu0 0
      %400 = vmatprep.subr.bf16.mxu0 0
      %401 = vmatpush1.bf16.msra.mxu0 0
      %402 = vmatprep.mubr.bf16.mxu0 0
      %403 = vmatmul.mubr.bf16.gmra.mrb[0].mxu0 %v365
      %v404 = vpop.f32.mrb[0].mxu0
      %v405 = vadd.f32 %v333, %v404
      %v406 = vpop.f32.mrb[0].mxu0
      %v407 = vpop.f32.mrb[0].mxu0
      %v408 = vadd.f32 %v333, %v407
      %v409 = vpop.f32.mrb[0].mxu0
      %410 = vmatprep.mubr.bf16.mxu0 0
      %411 = vmatmul.mubr.bf16.gmra.mrb[0].mxu0 %v368
      %v412 = vpop.f32.mrb[0].mxu0
      %v413 = vadd.f32 %v333, %v412
      %v414 = vpop.f32.mrb[0].mxu0
      %v415 = vpop.f32.mrb[0].mxu0
      %v416 = vadd.f32 %v333, %v415
      %v417 = vpop.f32.mrb[0].mxu0
      %418 = vdwg.mxu0
      %v419 = vmax.f32 %v405, 0.0
      %v420 = vmax.f32 %v408, 0.0
      %v421 = vmax.f32 %v413, 0.0
      %v422 = vmax.f32 %v416, 0.0
      %v423 = vpack.c.bf16 %v420, %v419
      %v424 = vpack.c.bf16 %v422, %v421
      %v425 = vld [vmem:[%s3] sm:$0xf]
      %v426 = vld [vmem:[%s3 + $0x4] sm:$0xf]
      %v427 = vld [vmem:[%s3 + $0x8] sm:$0xf]
      %v428 = vld [vmem:[%s3 + $0xc] sm:$0xf]
      %v429 = vld [vmem:[%s3 + $0x10] sm:$0xf]
      %v430 = vld [vmem:[%s3 + $0x14] sm:$0xf]
      %v431 = vld [vmem:[%s3 + $0x18] sm:$0xf]
      %v432 = vld [vmem:[%s3 + $0x1c] sm:$0xf]
      %v433 = vld [vmem:[%s3 + $0x20] sm:$0xf]
      %v434 = vld [vmem:[%s3 + $0x24] sm:$0xf]
      %v435 = vld [vmem:[%s3 + $0x28] sm:$0xf]
      %v436 = vld [vmem:[%s3 + $0x2c] sm:$0xf]
      %v437 = vld [vmem:[%s3 + $0x30] sm:$0xf]
      %v438 = vld [vmem:[%s3 + $0x34] sm:$0xf]
      %v439 = vld [vmem:[%s3 + $0x38] sm:$0xf]
      %v440 = vld [vmem:[%s3 + $0x3c] sm:$0xf]
      %v457 = vunpack.c.l.b16 %v425
      %v458 = vunpack.c.l.b16 %v426
      %v459 = vunpack.c.l.b16 %v427
      %v460 = vunpack.c.l.b16 %v428
      %v461 = vunpack.c.l.b16 %v429
      %v462 = vunpack.c.l.b16 %v430
      %v463 = vunpack.c.l.b16 %v431
      %v464 = vunpack.c.l.b16 %v432
      %v465 = vunpack.c.l.b16 %v433
      %v466 = vunpack.c.l.b16 %v434
      %v467 = vunpack.c.l.b16 %v435
      %v468 = vunpack.c.l.b16 %v436
      %v469 = vunpack.c.l.b16 %v437
      %v470 = vunpack.c.l.b16 %v438
      %v471 = vunpack.c.l.b16 %v439
      %v472 = vunpack.c.l.b16 %v440
      %v473 = vpack.c.b16 %v458, %v457
      %v474 = vpack.c.b16 %v460, %v459
      %v475 = vpack.c.b16 %v462, %v461
      %v476 = vpack.c.b16 %v464, %v463
      %v477 = vpack.c.b16 %v466, %v465
      %v478 = vpack.c.b16 %v468, %v467
      %v479 = vpack.c.b16 %v470, %v469
      %v480 = vpack.c.b16 %v472, %v471
      %489 = vmatprep.subr.bf16.mxu0 0
      %490 = vmatpush1.bf16.msra.mxu0 %v473
      %491 = vmatprep.subr.bf16.mxu0 0
      %492 = vmatpush1.bf16.msra.mxu0 %v474
      %493 = vmatprep.subr.bf16.mxu0 0
      %494 = vmatpush1.bf16.msra.mxu0 %v475
      %495 = vmatprep.subr.bf16.mxu0 0
      %496 = vmatpush1.bf16.msra.mxu0 %v476
      %497 = vmatprep.subr.bf16.mxu0 0
      %498 = vmatpush1.bf16.msra.mxu0 %v477
      %499 = vmatprep.subr.bf16.mxu0 0
      %500 = vmatpush1.bf16.msra.mxu0 %v478
      %501 = vmatprep.subr.bf16.mxu0 0
      %502 = vmatpush1.bf16.msra.mxu0 %v479
      %503 = vmatprep.subr.bf16.mxu0 0
      %504 = vmatpush1.bf16.msra.mxu0 %v480
      %505 = vmatprep.subr.bf16.mxu0 0
      %506 = vmatpush1.bf16.msra.mxu0 0
      %507 = vmatprep.subr.bf16.mxu0 0
      %508 = vmatpush1.bf16.msra.mxu0 0
      %509 = vmatprep.subr.bf16.mxu0 0
      %510 = vmatpush1.bf16.msra.mxu0 0
      %511 = vmatprep.subr.bf16.mxu0 0
      %512 = vmatpush1.bf16.msra.mxu0 0
      %513 = vmatprep.subr.bf16.mxu0 0
      %514 = vmatpush1.bf16.msra.mxu0 0
      %515 = vmatprep.subr.bf16.mxu0 0
      %516 = vmatpush1.bf16.msra.mxu0 0
      %517 = vmatprep.subr.bf16.mxu0 0
      %518 = vmatpush1.bf16.msra.mxu0 0
      %519 = vmatprep.subr.bf16.mxu0 0
      %520 = vmatpush1.bf16.msra.mxu0 0
      %521 = vmatprep.mubr.bf16.mxu0 0
      %522 = vmatmul.mubr.bf16.gmra.mrb[0].mxu0 %v423
      %v523 = vpop.f32.mrb[0].mxu0
      %v524 = vadd.f32 0.0, %v523
      %v525 = vpop.f32.mrb[0].mxu0
      %v526 = vpop.f32.mrb[0].mxu0
      %v527 = vadd.f32 0.0, %v526
      %v528 = vpop.f32.mrb[0].mxu0
      %529 = vmatprep.mubr.bf16.mxu0 0
      %530 = vmatmul.mubr.bf16.gmra.mrb[0].mxu0 %v424
      %v531 = vpop.f32.mrb[0].mxu0
      %v532 = vadd.f32 0.0, %v531
      %v533 = vpop.f32.mrb[0].mxu0
      %v534 = vpop.f32.mrb[0].mxu0
      %v535 = vadd.f32 0.0, %v534
      %v536 = vpop.f32.mrb[0].mxu0
      %537 = vdwg.mxu0
      %538 = vst [vmem:[%s310] sm:$0xff] %v524
      %539 = vst [vmem:[%s310 + $0x8] sm:$0xff] %v527
      %540 = vst [vmem:[%s310 + $0x10] sm:$0xff] %v532
      %541 = vst [vmem:[%s310 + $0x18] sm:$0xff] %v535
      %p542 = scmp.eq.s32.totalorder %s24, 0
      // Predicated region
      $region45: #{pixpro_forward.6} parent=43 // pred_check
        %p543 = pneg %p542
      $region46: #{pixpro_forward.6} parent=43 // pred_check_branch
        %545 = sbr.rel (%p543) target = $region48
      $region47: #{pixpro_forward.6} parent=43 // pred_region
        %546 = vst [vmem:[#allocation2] sm:$0x3] 0.0
      $region48: #{pixpro_forward.6} parent=43 // pred_fallthru
        _
      %v547 = vld [vmem:[#allocation2] sm:$0x1]
      %v548 = vadd.f32 %v524, %v527
      %v549 = vadd.f32 %v548, %v532
      %v550 = vadd.f32 %v549, %v535
      %v551 = vrot.slane %v550, 4
      %v552 = vadd.f32 %v550, %v551
      %v553 = vrot.slane %v552, 2
      %v554 = vadd.f32 %v552, %v553
      %v555 = vrot.slane %v554, 1
      %v556 = vadd.f32 %v554, %v555
      %v557 = vadd.f32 %v547, %v556
      %558 = vst [vmem:[#allocation2] sm:$0x1] %v557
      %v559 = vld [vmem:[#allocation2 + $0x1] sm:$0x1]
      %v560 = vmul.f32 %v524, %v524
      %v561 = vmul.f32 %v527, %v527
      %v562 = vmul.f32 %v532, %v532
      %v563 = vmul.f32 %v535, %v535
      %v564 = vadd.f32 %v560, %v561
      %v565 = vadd.f32 %v564, %v562
      %v566 = vadd.f32 %v565, %v563
      %v567 = vrot.slane %v566, 4
      %v568 = vadd.f32 %v566, %v567
      %v569 = vrot.slane %v568, 2
      %v570 = vadd.f32 %v568, %v569
      %v571 = vrot.slane %v570, 1
      %v572 = vadd.f32 %v570, %v571
      %v573 = vadd.f32 %v559, %v572
      %574 = vst [vmem:[#allocation2 + $0x1] sm:$0x1] %v573
      // Predicated region
      $region49: #{pixpro_forward.6} parent=43 // pred_check
        %p575 = pneg %p542
      $region50: #{pixpro_forward.6} parent=43 // pred_check_branch
        %577 = sbr.rel (%p575) target = $region52
      $region51: #{pixpro_forward.6} parent=43 // pred_region
        %v578 = vld [vmem:[#allocation2] sm:$0x1]
        %v579 = vmul.f32 %v578, 0.03125
        %v580 = vld [vmem:[#allocation2 + $0x1] sm:$0x1]
        %v581 = vmul.f32 %v580, 0.03125
        %v582 = vmul.f32 %v579, %v579
        %v583 = vsub.f32 %v581, %v582
        %v584 = vld [vmem:[%s4] sm:$0x1]
        %v585 = vadd.f32 %v583, 1e-05
        %v586 = vrsqrt.pop %v585
        %v587 = vmul.f32 %v584, %v586
        %v588 = vld [vmem:[%s5] sm:$0x1]
        %v589 = vmul.f32 %v579, %v587
        %v590 = vsub.f32 %v588, %v589
        %v592 = vlaneseq
        %v593 = vshrl.u32 %v592, 7
        %v594 = vsub.s32 0, %v593
        %v595 = vrot.slane %v590, %v594
        %vm597 = vcmask 1040384
        %v598 = vsel %vm597, %v587, %v595
        %599 = vst [vmem:[%s316] sm:$0x3] %v598
      $region52: #{pixpro_forward.6} parent=43 // pred_fallthru
        _
      %s600 = sadd.s32 %s23, %s24
      %s601 = smul.u32 4, %s600
      %p602 = scmp.lt.s32.totalorder %s601, 7
      %s603 = scalar_select %p602, %s601, 7
      %s604 = smul.addr %s603, 8
      %s605 = scalar_lea.vmem %s6, %s604
      %p606 = scmp.lt.s32.totalorder %s23, 1
      %s607 = scalar_select %p606, %s23, 1
      %s608 = smul.addr %s607, 2
      %s609 = scalar_lea.vmem %s7, %s608
      // Predicated region
      $region53: #{pixpro_forward.6} parent=43 // pred_check
        %p610 = pneg %p184
      $region54: #{pixpro_forward.6} parent=43 // pred_check_branch
        %612 = sbr.rel (%p610) target = $region56
      $region55: #{pixpro_forward.6} parent=43 // pred_region
        %s613 = sadd.s32 %s23, %s24
        %s614 = smul.u32 4, %s613
      $region56: #{pixpro_forward.6} parent=43 // pred_fallthru
        _
      // Predicated region
      $region57: #{pixpro_forward.6} parent=43 // pred_check
        %p615 = pneg %p210
      $region58: #{pixpro_forward.6} parent=43 // pred_check_branch
        %617 = sbr.rel (%p615) target = $region60
      $region59: #{pixpro_forward.6} parent=43 // pred_region
        _
      $region60: #{pixpro_forward.6} parent=43 // pred_fallthru
        _
    $region44: #{pixpro_forward.6} parent=5 // pred_fallthru
      _
    %p618 = scmp.le.s32.totalorder 2, %s14
    // Predicated region
    $region61: #{pixpro_forward.6} parent=5 // pred_check
      %p619 = pneg %p618
    $region62: #{pixpro_forward.6} parent=5 // pred_check_branch
      %621 = sbr.rel (%p619) target = $region64
    $region63: #{pixpro_forward.6} parent=5 // pred_region
      %s622 = ssub.s32 %s14, 2
      // Predicated region
      $region65: #{pixpro_forward.6} parent=63 // pred_check
        %p623 = pneg %p190
      $region66: #{pixpro_forward.6} parent=63 // pred_check_branch
        %625 = sbr.rel (%p623) target = $region68
      $region67: #{pixpro_forward.6} parent=63 // pred_region
        %s626 = sadd.s32 %s25, %s26
        %s627 = smul.u32 4, %s626
        %p628 = scmp.lt.s32.totalorder %s627, 7
        %s629 = scalar_select %p628, %s627, 7
        %s630 = smul.addr %s629, 8
        %s631 = scalar_lea.vmem %s6, %s630
      $region68: #{pixpro_forward.6} parent=63 // pred_fallthru
        _
      // Predicated region
      $region69: #{pixpro_forward.6} parent=63 // pred_check
        %p632 = pneg %p216
      $region70: #{pixpro_forward.6} parent=63 // pred_check_branch
        %634 = sbr.rel (%p632) target = $region72
      $region71: #{pixpro_forward.6} parent=63 // pred_region
        %p635 = scmp.lt.s32.totalorder %s25, 1
        %s636 = scalar_select %p635, %s25, 1
        %s637 = smul.addr %s636, 2
        %s638 = scalar_lea.vmem %s7, %s637
      $region72: #{pixpro_forward.6} parent=63 // pred_fallthru
        _
    $region64: #{pixpro_forward.6} parent=5 // pred_fallthru
      _
  $region6: #{pixpro_forward.6} parent=0 // loop_footer
    %s18 = sadd.s32 1, %s14
  $region7: #{pixpro_forward.6} parent=0 // loop_footer_branch
    %13 = sbr.rel target = $region3
  $region8: #{pixpro_forward.6} parent=0 // loop_exit
    _

// kernel: pixpro_forward.7
$region0: #{pixpro_forward.7}
  #allocation0 [shape = 'u32[]', space=smem, size = 0x4, offset = 0x4, fixed_abs, tag = 'smem constant byte address 0x4 - core index']
  #allocation1 [shape = 'u32[144,128]{1,0:T(1,128)}', space=vmem, size = 0x12000, scoped, tag = 'internal scratch']
  %s0 = inlined_call_operand.vmem [shape: f32[64,128], index: 0, kind: input, shape index: {}]
  %s1 = inlined_call_operand.vmem [shape: f32[2,2,128], index: 1, kind: input, shape index: {}]
  %s2 = inlined_call_operand.vmem [shape: bf16[128,256], index: 2, kind: input, shape index: {}]
  %s3 = inlined_call_operand.vmem [shape: f32[1,256], index: 3, kind: input, shape index: {}]
  %s4 = inlined_call_operand.vmem [shape: f32[64,256], index: 4, kind: output, shape index: {}]
  %s5 = sld [smem:[#allocation0]]
  $region49: #{pixpro_forward.7} parent=0
    _
  %s7 = ssub.s32 1, %s5
  %s8 = scalar_select 0, %s7, %s5
  loop: start=0, step=1, limit=4
  $region2: #{pixpro_forward.7} parent=0 // loop_pre_header
    _
  $region3: #{pixpro_forward.7} parent=0 // loop_header
    %s10 = sphi 0, %s14
    %p11 = scmp.ge.s32.totalorder %s10, 4
    %s17 = sphi 0, %s29
    %s18 = sphi 0, %s25
    %s19 = sphi 0, %s17
    %s20 = sphi 0, %s18
    %s21 = sphi 0, %s19
    %s22 = sphi 0, %s20
    %s34 = sphi 0, %s36
    %s37 = sphi 0, %s34
    %s38 = sphi 0, %s37
    %s54 = sphi 0, %s38
    %s60 = sphi 0, %s62
    %s63 = sphi 0, %s60
    %s64 = sphi 0, %s63
    %s80 = sphi 0, %s64
    %s84 = sphi 0, %s84
    %s86 = sphi 0, %s84
    %s87 = sphi 0, %s86
    %s101 = sphi 0, %s87
    %s105 = sphi 0, %s105
    %s107 = sphi 0, %s105
    %s108 = sphi 0, %s107
    %s122 = sphi 0, %s108
    %s130 = sphi 0, %s132
    %s133 = sphi 0, %s130
    %s134 = sphi 0, %s133
    %s150 = sphi 0, %s134
  $region4: #{pixpro_forward.7} parent=0 // loop_header_branch
    %13 = sbr.rel (%p11) target = $region8
  $region5: #{pixpro_forward.7} parent=0 // loop_body
    %s15 = ssub.s32 %s10, 1
    %s16 = ssub.s32 %s10, 2
    %s23 = sadd.s32 1, %s18
    %p24 = scmp.ge.s32.totalorder %s23, 1
    %s25 = scalar_select %p24, 0, %s23
    %s26 = sadd.s32 1, %s17
    %s27 = scalar_select %p24, %s26, %s17
    %p28 = scmp.ge.s32.totalorder %s27, 2
    %s29 = scalar_select %p28, 0, %s27
    %s30 = sadd.s32 %s17, %s18
    %s31 = sadd.s32 %s29, %s25
    %s32 = ssub.s32 %s30, %s31
    %p33 = scmp.eq.s32.totalorder %s32, 0
    %s35 = sadd.s32 %s34, 1
    %s36 = scalar_select %p33, %s34, %s35
    %p39 = pneg %p33
    %p40 = scmp.eq.s32.totalorder %s10, 1
    %p41 = por %p39, %p40
    %p42 = scmp.ne.s32.totalorder %s34, %s37
    %p43 = scmp.eq.s32.totalorder %s10, 0
    %p44 = por %p42, %p43
    %p45 = scmp.ne.s32.totalorder %s34, %s37
    %p46 = scmp.eq.s32.totalorder %s15, 1
    %p47 = por %p45, %p46
    %p48 = scmp.ne.s32.totalorder %s37, %s38
    %p49 = scmp.eq.s32.totalorder %s15, 0
    %p50 = por %p48, %p49
    %p51 = scmp.ne.s32.totalorder %s37, %s38
    %p52 = scmp.eq.s32.totalorder %s16, 1
    %p53 = por %p51, %p52
    %p55 = scmp.ne.s32.totalorder %s38, %s54
    %p56 = scmp.eq.s32.totalorder %s16, 0
    %p57 = por %p55, %p56
    %s58 = ssub.s32 %s17, %s29
    %p59 = scmp.eq.s32.totalorder %s58, 0
    %s61 = sadd.s32 %s60, 1
    %s62 = scalar_select %p59, %s60, %s61
    %p65 = pneg %p59
    %p66 = scmp.eq.s32.totalorder %s10, 1
    %p67 = por %p65, %p66
    %p68 = scmp.ne.s32.totalorder %s60, %s63
    %p69 = scmp.eq.s32.totalorder %s10, 0
    %p70 = por %p68, %p69
    %p71 = scmp.ne.s32.totalorder %s60, %s63
    %p72 = scmp.eq.s32.totalorder %s15, 1
    %p73 = por %p71, %p72
    %p74 = scmp.ne.s32.totalorder %s63, %s64
    %p75 = scmp.eq.s32.totalorder %s15, 0
    %p76 = por %p74, %p75
    %p77 = scmp.ne.s32.totalorder %s63, %s64
    %p78 = scmp.eq.s32.totalorder %s16, 1
    %p79 = por %p77, %p78
    %p81 = scmp.ne.s32.totalorder %s64, %s80
    %p82 = scmp.eq.s32.totalorder %s16, 0
    %p83 = por %p81, %p82
    %s85 = sadd.s32 %s84, 1
    %p88 = scmp.eq.s32.totalorder %s10, 1
    %p89 = scmp.ne.s32.totalorder %s84, %s86
    %p90 = scmp.eq.s32.totalorder %s10, 0
    %p91 = por %p89, %p90
    %p92 = scmp.ne.s32.totalorder %s84, %s86
    %p93 = scmp.eq.s32.totalorder %s15, 1
    %p94 = por %p92, %p93
    %p95 = scmp.ne.s32.totalorder %s86, %s87
    %p96 = scmp.eq.s32.totalorder %s15, 0
    %p97 = por %p95, %p96
    %p98 = scmp.ne.s32.totalorder %s86, %s87
    %p99 = scmp.eq.s32.totalorder %s16, 1
    %p100 = por %p98, %p99
    %p102 = scmp.ne.s32.totalorder %s87, %s101
    %p103 = scmp.eq.s32.totalorder %s16, 0
    %p104 = por %p102, %p103
    %s106 = sadd.s32 %s105, 1
    %p109 = scmp.eq.s32.totalorder %s10, 1
    %p110 = scmp.ne.s32.totalorder %s105, %s107
    %p111 = scmp.eq.s32.totalorder %s10, 0
    %p112 = por %p110, %p111
    %p113 = scmp.ne.s32.totalorder %s105, %s107
    %p114 = scmp.eq.s32.totalorder %s15, 1
    %p115 = por %p113, %p114
    %p116 = scmp.ne.s32.totalorder %s107, %s108
    %p117 = scmp.eq.s32.totalorder %s15, 0
    %p118 = por %p116, %p117
    %p119 = scmp.ne.s32.totalorder %s107, %s108
    %p120 = scmp.eq.s32.totalorder %s16, 1
    %p121 = por %p119, %p120
    %p123 = scmp.ne.s32.totalorder %s108, %s122
    %p124 = scmp.eq.s32.totalorder %s16, 0
    %p125 = por %p123, %p124
    %s126 = sadd.s32 %s17, %s18
    %s127 = sadd.s32 %s29, %s25
    %s128 = ssub.s32 %s126, %s127
    %p129 = scmp.eq.s32.totalorder %s128, 0
    %s131 = sadd.s32 %s130, 1
    %s132 = scalar_select %p129, %s130, %s131
    %p135 = pneg %p129
    %p136 = scmp.eq.s32.totalorder %s10, 1
    %p137 = por %p135, %p136
    %p138 = scmp.ne.s32.totalorder %s130, %s133
    %p139 = scmp.eq.s32.totalorder %s10, 0
    %p140 = por %p138, %p139
    %p141 = scmp.ne.s32.totalorder %s130, %s133
    %p142 = scmp.eq.s32.totalorder %s15, 1
    %p143 = por %p141, %p142
    %p144 = scmp.ne.s32.totalorder %s133, %s134
    %p145 = scmp.eq.s32.totalorder %s15, 0
    %p146 = por %p144, %p145
    %p147 = scmp.ne.s32.totalorder %s133, %s134
    %p148 = scmp.eq.s32.totalorder %s16, 1
    %p149 = por %p147, %p148
    %p151 = scmp.ne.s32.totalorder %s134, %s150
    %p152 = scmp.eq.s32.totalorder %s16, 0
    %p153 = por %p151, %p152
    %p154 = scmp.le.s32.totalorder 1, %s10
    %p155 = scmp.lt.s32.totalorder %s10, 3
    %p156 = pnand %p154, %p155
    %p157 = pneg %p156
    // Predicated region
    $region9: #{pixpro_forward.7} parent=5 // pred_check
      _
    $region10: #{pixpro_forward.7} parent=5 // pred_check_branch
      %159 = sbr.rel (%p156) target = $region12
    $region11: #{pixpro_forward.7} parent=5 // pred_region
      %s160 = ssub.s32 %s10, 1
      // Predicated region
      $region13: #{pixpro_forward.7} parent=11 // pred_check
        %p161 = pneg %p97
      $region14: #{pixpro_forward.7} parent=11 // pred_check_branch
        %163 = sbr.rel (%p161) target = $region16
      $region15: #{pixpro_forward.7} parent=11 // pred_region
        _
      $region16: #{pixpro_forward.7} parent=11 // pred_fallthru
        _
      // Predicated region
      $region17: #{pixpro_forward.7} parent=11 // pred_check
        %p164 = pneg %p118
      $region18: #{pixpro_forward.7} parent=11 // pred_check_branch
        %166 = sbr.rel (%p164) target = $region20
      $region19: #{pixpro_forward.7} parent=11 // pred_region
        _
      $region20: #{pixpro_forward.7} parent=11 // pred_fallthru
        _
    $region12: #{pixpro_forward.7} parent=5 // pred_fallthru
      _
    %p167 = scmp.lt.s32.totalorder %s10, 2
    // Predicated region
    $region21: #{pixpro_forward.7} parent=5 // pred_check
      %p168 = pneg %p167
    $region22: #{pixpro_forward.7} parent=5 // pred_check_branch
      %170 = sbr.rel (%p168) target = $region24
    $region23: #{pixpro_forward.7} parent=5 // pred_region
      // Predicated region
      $region25: #{pixpro_forward.7} parent=23 // pred_check
        %p171 = pneg %p44
      $region26: #{pixpro_forward.7} parent=23 // pred_check_branch
        %173 = sbr.rel (%p171) target = $region28
      $region27: #{pixpro_forward.7} parent=23 // pred_region
        %s174 = sadd.s32 %s17, %s18
        %s175 = smul.u32 4, %s174
        %p176 = scmp.lt.s32.totalorder %s175, 7
        %s177 = scalar_select %p176, %s175, 7
        %s178 = smul.addr %s177, 8
        %s179 = scalar_lea.vmem %s0, %s178
        %s180 = sadd.s32 %s17, %s18
        %s181 = smul.u32 4, %s180
      $region28: #{pixpro_forward.7} parent=23 // pred_fallthru
        _
      // Predicated region
      $region29: #{pixpro_forward.7} parent=23 // pred_check
        %p182 = pneg %p70
      $region30: #{pixpro_forward.7} parent=23 // pred_check_branch
        %184 = sbr.rel (%p182) target = $region32
      $region31: #{pixpro_forward.7} parent=23 // pred_region
        %p185 = scmp.lt.s32.totalorder %s17, 1
        %s186 = scalar_select %p185, %s17, 1
        %s187 = smul.addr %s186, 2
        %s188 = scalar_lea.vmem %s1, %s187
      $region32: #{pixpro_forward.7} parent=23 // pred_fallthru
        _
    $region24: #{pixpro_forward.7} parent=5 // pred_fallthru
      _
    %p189 = scmp.le.s32.totalorder 1, %s10
    %p190 = scmp.lt.s32.totalorder %s10, 3
    %p191 = pnand %p189, %p190
    %p192 = pneg %p191
    // Predicated region
    $region33: #{pixpro_forward.7} parent=5 // pred_check
      _
    $region34: #{pixpro_forward.7} parent=5 // pred_check_branch
      %194 = sbr.rel (%p191) target = $region36
    $region35: #{pixpro_forward.7} parent=5 // pred_region
      %s195 = ssub.s32 %s10, 1
      %s196 = sadd.s32 %s19, %s20
      %s197 = smul.u32 4, %s196
      %p198 = scmp.lt.s32.totalorder %s197, 7
      %s199 = scalar_select %p198, %s197, 7
      %s200 = smul.addr %s199, 8
      %s201 = scalar_lea.vmem %s0, %s200
      %p202 = pneg %p50
      %p203 = pneg %p47
      %p204 = scmp.lt.s32.totalorder %s19, 1
      %s205 = scalar_select %p204, %s19, 1
      %s206 = smul.addr %s205, 2
      %s207 = scalar_lea.vmem %s1, %s206
      %p208 = pneg %p76
      %p209 = pneg %p73
      %p210 = pneg %p97
      %p211 = pneg %p94
      %p212 = pneg %p118
      %p213 = pneg %p115
      %p214 = pneg %p146
      %p215 = pneg %p143
      %s216 = sadd.s32 %s19, %s20
      %s217 = smul.u32 4, %s216
      %p218 = scmp.lt.s32.totalorder %s217, 7
      %s219 = scalar_select %p218, %s217, 7
      %s220 = smul.addr %s219, 2
      %s221 = smul.addr %s220, 8
      %s222 = scalar_lea.vmem %s4, %s221
      %s223 = sadd.s32 %s19, %s20
      %s224 = smul.u32 4, %s223
      %p225 = scmp.lt.s32.totalorder %s224, 7
      %s226 = scalar_select %p225, %s224, 7
      %s227 = smul.addr %s226, 8
      %s228 = scalar_lea.vmem %s0, %s227
      %s229 = sadd.s32 %s19, %s20
      %s230 = smul.u32 4, %s229
      %p231 = scmp.lt.s32.totalorder %s19, 1
      %s232 = scalar_select %p231, %s19, 1
      %s233 = smul.addr %s232, 2
      %s234 = scalar_lea.vmem %s1, %s233
      %s235 = sadd.s32 %s19, %s20
      %s236 = smul.u32 4, %s235
      %p237 = scmp.lt.s32.totalorder %s236, 7
      %s238 = scalar_select %p237, %s236, 7
      %s239 = smul.addr %s238, 2
      %s240 = smul.addr %s239, 8
      %s241 = scalar_lea.vmem %s4, %s240
      %s242 = sadd.s32 %s19, %s20
      %s243 = smul.u32 4, %s242
      %v245 = vld [vmem:[%s234] sm:$0x3]
      %v246 = vld [vmem:[%s228] sm:$0xff]
      %v247 = vld [vmem:[%s228 + $0x8] sm:$0xff]
      %v248 = vld [vmem:[%s228 + $0x10] sm:$0xff]
      %v249 = vld [vmem:[%s228 + $0x18] sm:$0xff]
      %v250 = vlaneseq
      %v251 = vshrl.u32 %v250, 7
      %v252 = vsub.s32 0, %v251
      %v253 = vrot.slane %v245, %v252
      %v254 = vmul.f32 %v246, %v253
      %v255 = vmul.f32 %v247, %v253
      %v256 = vmul.f32 %v248, %v253
      %v257 = vmul.f32 %v249, %v253
      %v258 = vlaneseq
      %v259 = vshrl.u32 %v258, 7
      %v260 = vsub.s32 1, %v259
      %v261 = vrot.slane %v245, %v260
      %v262 = vadd.f32 %v254, %v261
      %v263 = vadd.f32 %v255, %v261
      %v264 = vadd.f32 %v256, %v261
      %v265 = vadd.f32 %v257, %v261
      %v266 = vmax.f32 %v262, 0.0
      %v267 = vmax.f32 %v263, 0.0
      %v268 = vmax.f32 %v264, 0.0
      %v269 = vmax.f32 %v265, 0.0
      %v270 = vpack.c.bf16 %v267, %v266
      %v271 = vpack.c.bf16 %v269, %v268
      %v272 = vld [vmem:[%s2] sm:$0xff]
      %v273 = vld [vmem:[%s2 + $0x8] sm:$0xff]
      %v274 = vld [vmem:[%s2 + $0x10] sm:$0xff]
      %v275 = vld [vmem:[%s2 + $0x18] sm:$0xff]
      %v276 = vld [vmem:[%s2 + $0x20] sm:$0xff]
      %v277 = vld [vmem:[%s2 + $0x28] sm:$0xff]
      %v278 = vld [vmem:[%s2 + $0x30] sm:$0xff]
      %v279 = vld [vmem:[%s2 + $0x38] sm:$0xff]
      %v280 = vld [vmem:[%s2 + $0x40] sm:$0xff]
      %v281 = vld [vmem:[%s2 + $0x48] sm:$0xff]
      %v282 = vld [vmem:[%s2 + $0x50] sm:$0xff]
      %v283 = vld [vmem:[%s2 + $0x58] sm:$0xff]
      %v284 = vld [vmem:[%s2 + $0x60] sm:$0xff]
      %v285 = vld [vmem:[%s2 + $0x68] sm:$0xff]
      %v286 = vld [vmem:[%s2 + $0x70] sm:$0xff]
      %v287 = vld [vmem:[%s2 + $0x78] sm:$0xff]
      %v288 = vld [vmem:[%s3] sm:$0x3]
      %v290 = vlaneseq
      %v291 = vshrl.u32 %v290, 7
      %v292 = vsub.s32 0, %v291
      %v293 = vrot.slane %v288, %v292
      %v294 = vlaneseq
      %v295 = vshrl.u32 %v294, 7
      %v296 = vsub.s32 1, %v295
      %v297 = vrot.slane %v288, %v296
      %v316 = vunpack.c.l.b16 %v272
      %v317 = vunpack.c.h.b16 %v272
      %v318 = vunpack.c.l.b16 %v273
      %v319 = vunpack.c.h.b16 %v273
      %v320 = vunpack.c.l.b16 %v274
      %v321 = vunpack.c.h.b16 %v274
      %v322 = vunpack.c.l.b16 %v275
      %v323 = vunpack.c.h.b16 %v275
      %v324 = vunpack.c.l.b16 %v276
      %v325 = vunpack.c.h.b16 %v276
      %v326 = vunpack.c.l.b16 %v277
      %v327 = vunpack.c.h.b16 %v277
      %v328 = vunpack.c.l.b16 %v278
      %v329 = vunpack.c.h.b16 %v278
      %v330 = vunpack.c.l.b16 %v279
      %v331 = vunpack.c.h.b16 %v279
      %v332 = vunpack.c.l.b16 %v280
      %v333 = vunpack.c.h.b16 %v280
      %v334 = vunpack.c.l.b16 %v281
      %v335 = vunpack.c.h.b16 %v281
      %v336 = vunpack.c.l.b16 %v282
      %v337 = vunpack.c.h.b16 %v282
      %v338 = vunpack.c.l.b16 %v283
      %v339 = vunpack.c.h.b16 %v283
      %v340 = vunpack.c.l.b16 %v284
      %v341 = vunpack.c.h.b16 %v284
      %v342 = vunpack.c.l.b16 %v285
      %v343 = vunpack.c.h.b16 %v285
      %v344 = vunpack.c.l.b16 %v286
      %v345 = vunpack.c.h.b16 %v286
      %v346 = vunpack.c.l.b16 %v287
      %v347 = vunpack.c.h.b16 %v287
      %v348 = vpack.c.b16 %v318, %v316
      %v349 = vpack.c.b16 %v319, %v317
      %v350 = vpack.c.b16 %v322, %v320
      %v351 = vpack.c.b16 %v323, %v321
      %v352 = vpack.c.b16 %v326, %v324
      %v353 = vpack.c.b16 %v327, %v325
      %v354 = vpack.c.b16 %v330, %v328
      %v355 = vpack.c.b16 %v331, %v329
      %v356 = vpack.c.b16 %v334, %v332
      %v357 = vpack.c.b16 %v335, %v333
      %v358 = vpack.c.b16 %v338, %v336
      %v359 = vpack.c.b16 %v339, %v337
      %v360 = vpack.c.b16 %v342, %v340
      %v361 = vpack.c.b16 %v343, %v341
      %v362 = vpack.c.b16 %v346, %v344
      %v363 = vpack.c.b16 %v347, %v345
      %380 = vmatprep.subr.bf16.mxu0 %v349
      %381 = vmatpush1.bf16.msra.mxu0 %v348
      %382 = vmatprep.subr.bf16.mxu0 %v351
      %383 = vmatpush1.bf16.msra.mxu0 %v350
      %384 = vmatprep.subr.bf16.mxu0 %v353
      %385 = vmatpush1.bf16.msra.mxu0 %v352
      %386 = vmatprep.subr.bf16.mxu0 %v355
      %387 = vmatpush1.bf16.msra.mxu0 %v354
      %388 = vmatprep.subr.bf16.mxu0 %v357
      %389 = vmatpush1.bf16.msra.mxu0 %v356
      %390 = vmatprep.subr.bf16.mxu0 %v359
      %391 = vmatpush1.bf16.msra.mxu0 %v358
      %392 = vmatprep.subr.bf16.mxu0 %v361
      %393 = vmatpush1.bf16.msra.mxu0 %v360
      %394 = vmatprep.subr.bf16.mxu0 %v363
      %395 = vmatpush1.bf16.msra.mxu0 %v362
      %396 = vmatprep.subr.bf16.mxu0 0
      %397 = vmatpush1.bf16.msra.mxu0 0
      %398 = vmatprep.subr.bf16.mxu0 0
      %399 = vmatpush1.bf16.msra.mxu0 0
      %400 = vmatprep.subr.bf16.mxu0 0
      %401 = vmatpush1.bf16.msra.mxu0 0
      %402 = vmatprep.subr.bf16.mxu0 0
      %403 = vmatpush1.bf16.msra.mxu0 0
      %404 = vmatprep.subr.bf16.mxu0 0
      %405 = vmatpush1.bf16.msra.mxu0 0
      %406 = vmatprep.subr.bf16.mxu0 0
      %407 = vmatpush1.bf16.msra.mxu0 0
      %408 = vmatprep.subr.bf16.mxu0 0
      %409 = vmatpush1.bf16.msra.mxu0 0
      %410 = vmatprep.subr.bf16.mxu0 0
      %411 = vmatpush1.bf16.msra.mxu0 0
      %412 = vmatprep.mubr.bf16.mxu0 0
      %413 = vmatmul.mubr.bf16.gmra.mrb[0].mxu0 %v270
      %v414 = vpop.f32.mrb[0].mxu0
      %v415 = vadd.f32 %v293, %v414
      %v416 = vpop.f32.mrb[0].mxu0
      %v417 = vadd.f32 %v297, %v416
      %v418 = vpop.f32.mrb[0].mxu0
      %v419 = vadd.f32 %v293, %v418
      %v420 = vpop.f32.mrb[0].mxu0
      %v421 = vadd.f32 %v297, %v420
      %422 = vmatprep.mubr.bf16.mxu0 0
      %423 = vmatmul.mubr.bf16.gmra.mrb[0].mxu0 %v271
      %v424 = vpop.f32.mrb[0].mxu0
      %v425 = vadd.f32 %v293, %v424
      %v426 = vpop.f32.mrb[0].mxu0
      %v427 = vadd.f32 %v297, %v426
      %v428 = vpop.f32.mrb[0].mxu0
      %v429 = vadd.f32 %v293, %v428
      %v430 = vpop.f32.mrb[0].mxu0
      %v431 = vadd.f32 %v297, %v430
      %432 = vdwg.mxu0
      %433 = vst [vmem:[%s241] sm:$0xff] %v415
      %434 = vst [vmem:[%s241 + $0x8] sm:$0xff] %v417
      %435 = vst [vmem:[%s241 + $0x10] sm:$0xff] %v419
      %436 = vst [vmem:[%s241 + $0x18] sm:$0xff] %v421
      %437 = vst [vmem:[%s241 + $0x20] sm:$0xff] %v425
      %438 = vst [vmem:[%s241 + $0x28] sm:$0xff] %v427
      %439 = vst [vmem:[%s241 + $0x30] sm:$0xff] %v429
      %440 = vst [vmem:[%s241 + $0x38] sm:$0xff] %v431
      %s441 = sadd.s32 %s19, %s20
      %s442 = smul.u32 4, %s441
      %p443 = scmp.lt.s32.totalorder %s442, 7
      %s444 = scalar_select %p443, %s442, 7
      %s445 = smul.addr %s444, 2
      %s446 = smul.addr %s445, 8
      %s447 = scalar_lea.vmem %s4, %s446
      // Predicated region
      $region37: #{pixpro_forward.7} parent=35 // pred_check
        %p448 = pneg %p143
      $region38: #{pixpro_forward.7} parent=35 // pred_check_branch
        %450 = sbr.rel (%p448) target = $region40
      $region39: #{pixpro_forward.7} parent=35 // pred_region
        %s451 = sadd.s32 %s19, %s20
        %s452 = smul.u32 4, %s451
      $region40: #{pixpro_forward.7} parent=35 // pred_fallthru
        _
    $region36: #{pixpro_forward.7} parent=5 // pred_fallthru
      _
    %p453 = scmp.le.s32.totalorder 2, %s10
    // Predicated region
    $region41: #{pixpro_forward.7} parent=5 // pred_check
      %p454 = pneg %p453
    $region42: #{pixpro_forward.7} parent=5 // pred_check_branch
      %456 = sbr.rel (%p454) target = $region44
    $region43: #{pixpro_forward.7} parent=5 // pred_region
      %s457 = ssub.s32 %s10, 2
      // Predicated region
      $region45: #{pixpro_forward.7} parent=43 // pred_check
        %p458 = pneg %p149
      $region46: #{pixpro_forward.7} parent=43 // pred_check_branch
        %460 = sbr.rel (%p458) target = $region48
      $region47: #{pixpro_forward.7} parent=43 // pred_region
        %s461 = sadd.s32 %s21, %s22
        %s462 = smul.u32 4, %s461
        %p463 = scmp.lt.s32.totalorder %s462, 7
        %s464 = scalar_select %p463, %s462, 7
        %s465 = smul.addr %s464, 2
        %s466 = smul.addr %s465, 8
        %s467 = scalar_lea.vmem %s4, %s466
      $region48: #{pixpro_forward.7} parent=43 // pred_fallthru
        _
    $region44: #{pixpro_forward.7} parent=5 // pred_fallthru
      _
  $region6: #{pixpro_forward.7} parent=0 // loop_footer
    %s14 = sadd.s32 1, %s10
  $region7: #{pixpro_forward.7} parent=0 // loop_footer_branch
    %9 = sbr.rel target = $region3
  $region8: #{pixpro_forward.7} parent=0 // loop_exit
    _

// kernel: pixpro_forward.8
$region0: #{pixpro_forward.8}
  #allocation0 [shape = 'u32[]', space=smem, size = 0x4, offset = 0x4, fixed_abs, tag = 'smem constant byte address 0x4 - core index']
  #allocation1 [shape = 'u32[144,128]{1,0:T(1,128)}', space=vmem, size = 0x12000, scoped, tag = 'internal scratch']
  %s0 = inlined_call_operand.vmem [shape: f32[64,256], index: 0, kind: input, shape index: {}]
  %s1 = inlined_call_operand.vmem [shape: bf16[256,256], index: 1, kind: input, shape index: {}]
  %s2 = inlined_call_operand.vmem [shape: f32[1,256], index: 2, kind: input, shape index: {}]
  %s3 = inlined_call_operand.vmem [shape: bf16[64,256], index: 3, kind: output, shape index: {0}]
  %s4 = inlined_call_operand.vmem [shape: bf16[64,256], index: 4, kind: output, shape index: {1}]
  %5 = xla_tuple %s3, %s4
  %s6 = sld [smem:[#allocation0]]
  $region30: #{pixpro_forward.8} parent=0
    _
  %s8 = ssub.s32 1, %s6
  %s9 = scalar_select 0, %s8, %s6
  // Predicated region
  $region2: #{pixpro_forward.8} parent=0 // pred_check
    _
  $region3: #{pixpro_forward.8} parent=0 // pred_check_branch
    %11 = sbr.rel (0) target = $region5
  $region4: #{pixpro_forward.8} parent=0 // pred_region
    _
  $region5: #{pixpro_forward.8} parent=0 // pred_fallthru
    _
  // Predicated region
  $region6: #{pixpro_forward.8} parent=0 // pred_check
    _
  $region7: #{pixpro_forward.8} parent=0 // pred_check_branch
    %13 = sbr.rel (0) target = $region9
  $region8: #{pixpro_forward.8} parent=0 // pred_region
    _
  $region9: #{pixpro_forward.8} parent=0 // pred_fallthru
    _
  // Predicated region
  $region10: #{pixpro_forward.8} parent=0 // pred_check
    _
  $region11: #{pixpro_forward.8} parent=0 // pred_check_branch
    %15 = sbr.rel (0) target = $region13
  $region12: #{pixpro_forward.8} parent=0 // pred_region
    _
  $region13: #{pixpro_forward.8} parent=0 // pred_fallthru
    _
  %v16 = vld [vmem:[%s0] sm:$0xff]
  %v17 = vld [vmem:[%s0 + $0x8] sm:$0xff]
  %v18 = vld [vmem:[%s0 + $0x10] sm:$0xff]
  %v19 = vld [vmem:[%s0 + $0x18] sm:$0xff]
  %v20 = vld [vmem:[%s0 + $0x20] sm:$0xff]
  %v21 = vld [vmem:[%s0 + $0x28] sm:$0xff]
  %v22 = vld [vmem:[%s0 + $0x30] sm:$0xff]
  %v23 = vld [vmem:[%s0 + $0x38] sm:$0xff]
  %v24 = vld [vmem:[%s0 + $0x40] sm:$0xff]
  %v25 = vld [vmem:[%s0 + $0x48] sm:$0xff]
  %v26 = vld [vmem:[%s0 + $0x50] sm:$0xff]
  %v27 = vld [vmem:[%s0 + $0x58] sm:$0xff]
  %v28 = vld [vmem:[%s0 + $0x60] sm:$0xff]
  %v29 = vld [vmem:[%s0 + $0x68] sm:$0xff]
  %v30 = vld [vmem:[%s0 + $0x70] sm:$0xff]
  %v31 = vld [vmem:[%s0 + $0x78] sm:$0xff]
  %v32 = vmul.f32 %v16, %v16
  %v33 = vmul.f32 %v17, %v17
  %v34 = vmul.f32 %v18, %v18
  %v35 = vmul.f32 %v19, %v19
  %v36 = vmul.f32 %v20, %v20
  %v37 = vmul.f32 %v21, %v21
  %v38 = vmul.f32 %v22, %v22
  %v39 = vmul.f32 %v23, %v23
  %v40 = vmul.f32 %v24, %v24
  %v41 = vmul.f32 %v25, %v25
  %v42 = vmul.f32 %v26, %v26
  %v43 = vmul.f32 %v27, %v27
  %v44 = vmul.f32 %v28, %v28
  %v45 = vmul.f32 %v29, %v29
  %v46 = vmul.f32 %v30, %v30
  %v47 = vmul.f32 %v31, %v31
  %v48 = vadd.f32 %v32, %v33
  %49 = vadd.xlane.f32.xlu0 %v48
  %v50 = vpop.xlane.xlu0 %49
  %v51 = vadd.f32 %v34, %v35
  %52 = vadd.xlane.f32.xlu0 %v51
  %v53 = vpop.xlane.xlu0 %52
  %v54 = vadd.f32 %v36, %v37
  %55 = vadd.xlane.f32.xlu0 %v54
  %v56 = vpop.xlane.xlu0 %55
  %v57 = vadd.f32 %v38, %v39
  %58 = vadd.xlane.f32.xlu0 %v57
  %v59 = vpop.xlane.xlu0 %58
  %v60 = vadd.f32 %v40, %v41
  %61 = vadd.xlane.f32.xlu0 %v60
  %v62 = vpop.xlane.xlu0 %61
  %v63 = vadd.f32 %v42, %v43
  %64 = vadd.xlane.f32.xlu0 %v63
  %v65 = vpop.xlane.xlu0 %64
  %v66 = vadd.f32 %v44, %v45
  %67 = vadd.xlane.f32.xlu0 %v66
  %v68 = vpop.xlane.xlu0 %67
  %v69 = vadd.f32 %v46, %v47
  %70 = vadd.xlane.f32.xlu0 %v69
  %v71 = vpop.xlane.xlu0 %70
  %v72 = vmax.f32 %v50, 1e-16
  %v73 = vmax.f32 %v53, 1e-16
  %v74 = vmax.f32 %v56, 1e-16
  %v75 = vmax.f32 %v59, 1e-16
  %v76 = vmax.f32 %v62, 1e-16
  %v77 = vmax.f32 %v65, 1e-16
  %v78 = vmax.f32 %v68, 1e-16
  %v79 = vmax.f32 %v71, 1e-16
  %v80 = vrsqrt.pop %v72
  %v81 = vrsqrt.pop %v73
  %v82 = vrsqrt.pop %v74
  %v83 = vrsqrt.pop %v75
  %v84 = vrsqrt.pop %v76
  %v85 = vrsqrt.pop %v77
  %v86 = vrsqrt.pop %v78
  %v87 = vrsqrt.pop %v79
  %v88 = vmul.f32 %v16, %v80
  %v89 = vmul.f32 %v17, %v80
  %v90 = vmul.f32 %v18, %v81
  %v91 = vmul.f32 %v19, %v81
  %v92 = vmul.f32 %v20, %v82
  %v93 = vmul.f32 %v21, %v82
  %v94 = vmul.f32 %v22, %v83
  %v95 = vmul.f32 %v23, %v83
  %v96 = vmul.f32 %v24, %v84
  %v97 = vmul.f32 %v25, %v84
  %v98 = vmul.f32 %v26, %v85
  %v99 = vmul.f32 %v27, %v85
  %v100 = vmul.f32 %v28, %v86
  %v101 = vmul.f32 %v29, %v86
  %v102 = vmul.f32 %v30, %v87
  %v103 = vmul.f32 %v31, %v87
  %v104 = vpack.c.bf16 %v90, %v88
  %v105 = vpack.c.bf16 %v91, %v89
  %v106 = vpack.c.bf16 %v94, %v92
  %v107 = vpack.c.bf16 %v95, %v93
  %v108 = vpack.c.bf16 %v98, %v96
  %v109 = vpack.c.bf16 %v99, %v97
  %v110 = vpack.c.bf16 %v102, %v100
  %v111 = vpack.c.bf16 %v103, %v101
  %v120 = vunpack.c.l.b16 %v104
  %v121 = vunpack.c.l.b16 %v105
  %v122 = vunpack.c.h.b16 %v104
  %v123 = vunpack.c.h.b16 %v105
  %v124 = vunpack.c.l.b16 %v106
  %v125 = vunpack.c.l.b16 %v107
  %v126 = vunpack.c.h.b16 %v106
  %v127 = vunpack.c.h.b16 %v107
  %v128 = vunpack.c.l.b16 %v108
  %v129 = vunpack.c.l.b16 %v109
  %v130 = vunpack.c.h.b16 %v108
  %v131 = vunpack.c.h.b16 %v109
  %v132 = vunpack.c.l.b16 %v110
  %v133 = vunpack.c.l.b16 %v111
  %v134 = vunpack.c.h.b16 %v110
  %v135 = vunpack.c.h.b16 %v111
  %v136 = vpack.c.b16 %v121, %v120
  %v137 = vpack.c.b16 %v123, %v122
  %v138 = vpack.c.b16 %v125, %v124
  %v139 = vpack.c.b16 %v127, %v126
  %v140 = vpack.c.b16 %v129, %v128
  %v141 = vpack.c.b16 %v131, %v130
  %v142 = vpack.c.b16 %v133, %v132
  %v143 = vpack.c.b16 %v135, %v134
  %152 = vst [vmem:[%s3] sm:$0xff] %v136
  %153 = vst [vmem:[%s3 + $0x8] sm:$0xff] %v137
  %154 = vst [vmem:[%s3 + $0x10] sm:$0xff] %v138
  %155 = vst [vmem:[%s3 + $0x18] sm:$0xff] %v139
  %156 = vst [vmem:[%s3 + $0x20] sm:$0xff] %v140
  %157 = vst [vmem:[%s3 + $0x28] sm:$0xff] %v141
  %158 = vst [vmem:[%s3 + $0x30] sm:$0xff] %v142
  %159 = vst [vmem:[%s3 + $0x38] sm:$0xff] %v143
  %v160 = vpack.c.bf16 %v18, %v16
  %v161 = vpack.c.bf16 %v19, %v17
  %v162 = vpack.c.bf16 %v22, %v20
  %v163 = vpack.c.bf16 %v23, %v21
  %v164 = vpack.c.bf16 %v26, %v24
  %v165 = vpack.c.bf16 %v27, %v25
  %v166 = vpack.c.bf16 %v30, %v28
  %v167 = vpack.c.bf16 %v31, %v29
  %v168 = vld [vmem:[%s1] sm:$0xff]
  %v169 = vld [vmem:[%s1 + $0x8] sm:$0xff]
  %v170 = vld [vmem:[%s1 + $0x10] sm:$0xff]
  %v171 = vld [vmem:[%s1 + $0x18] sm:$0xff]
  %v172 = vld [vmem:[%s1 + $0x20] sm:$0xff]
  %v173 = vld [vmem:[%s1 + $0x28] sm:$0xff]
  %v174 = vld [vmem:[%s1 + $0x30] sm:$0xff]
  %v175 = vld [vmem:[%s1 + $0x38] sm:$0xff]
  %v176 = vld [vmem:[%s1 + $0x40] sm:$0xff]
  %v177 = vld [vmem:[%s1 + $0x48] sm:$0xff]
  %v178 = vld [vmem:[%s1 + $0x50] sm:$0xff]
  %v179 = vld [vmem:[%s1 + $0x58] sm:$0xff]
  %v180 = vld [vmem:[%s1 + $0x60] sm:$0xff]
  %v181 = vld [vmem:[%s1 + $0x68] sm:$0xff]
  %v182 = vld [vmem:[%s1 + $0x70] sm:$0xff]
  %v183 = vld [vmem:[%s1 + $0x78] sm:$0xff]
  %v184 = vld [vmem:[%s1 + $0x80] sm:$0xff]
  %v185 = vld [vmem:[%s1 + $0x88] sm:$0xff]
  %v186 = vld [vmem:[%s1 + $0x90] sm:$0xff]
  %v187 = vld [vmem:[%s1 + $0x98] sm:$0xff]
  %v188 = vld [vmem:[%s1 + $0xa0] sm:$0xff]
  %v189 = vld [vmem:[%s1 + $0xa8] sm:$0xff]
  %v190 = vld [vmem:[%s1 + $0xb0] sm:$0xff]
  %v191 = vld [vmem:[%s1 + $0xb8] sm:$0xff]
  %v192 = vld [vmem:[%s1 + $0xc0] sm:$0xff]
  %v193 = vld [vmem:[%s1 + $0xc8] sm:$0xff]
  %v194 = vld [vmem:[%s1 + $0xd0] sm:$0xff]
  %v195 = vld [vmem:[%s1 + $0xd8] sm:$0xff]
  %v196 = vld [vmem:[%s1 + $0xe0] sm:$0xff]
  %v197 = vld [vmem:[%s1 + $0xe8] sm:$0xff]
  %v198 = vld [vmem:[%s1 + $0xf0] sm:$0xff]
  %v199 = vld [vmem:[%s1 + $0xf8] sm:$0xff]
  %v200 = vld [vmem:[%s2] sm:$0x3]
  %v202 = vlaneseq
  %v203 = vshrl.u32 %v202, 7
  %v204 = vsub.s32 0, %v203
  %v205 = vrot.slane %v200, %v204
  %v206 = vlaneseq
  %v207 = vshrl.u32 %v206, 7
  %v208 = vsub.s32 1, %v207
  %v209 = vrot.slane %v200, %v208
  %v244 = vunpack.c.l.b16 %v168
  %v245 = vunpack.c.h.b16 %v168
  %v246 = vunpack.c.l.b16 %v169
  %v247 = vunpack.c.h.b16 %v169
  %v248 = vunpack.c.l.b16 %v170
  %v249 = vunpack.c.h.b16 %v170
  %v250 = vunpack.c.l.b16 %v171
  %v251 = vunpack.c.h.b16 %v171
  %v252 = vunpack.c.l.b16 %v172
  %v253 = vunpack.c.h.b16 %v172
  %v254 = vunpack.c.l.b16 %v173
  %v255 = vunpack.c.h.b16 %v173
  %v256 = vunpack.c.l.b16 %v174
  %v257 = vunpack.c.h.b16 %v174
  %v258 = vunpack.c.l.b16 %v175
  %v259 = vunpack.c.h.b16 %v175
  %v260 = vunpack.c.l.b16 %v176
  %v261 = vunpack.c.h.b16 %v176
  %v262 = vunpack.c.l.b16 %v177
  %v263 = vunpack.c.h.b16 %v177
  %v264 = vunpack.c.l.b16 %v178
  %v265 = vunpack.c.h.b16 %v178
  %v266 = vunpack.c.l.b16 %v179
  %v267 = vunpack.c.h.b16 %v179
  %v268 = vunpack.c.l.b16 %v180
  %v269 = vunpack.c.h.b16 %v180
  %v270 = vunpack.c.l.b16 %v181
  %v271 = vunpack.c.h.b16 %v181
  %v272 = vunpack.c.l.b16 %v182
  %v273 = vunpack.c.h.b16 %v182
  %v274 = vunpack.c.l.b16 %v183
  %v275 = vunpack.c.h.b16 %v183
  %v276 = vunpack.c.l.b16 %v184
  %v277 = vunpack.c.h.b16 %v184
  %v278 = vunpack.c.l.b16 %v185
  %v279 = vunpack.c.h.b16 %v185
  %v280 = vunpack.c.l.b16 %v186
  %v281 = vunpack.c.h.b16 %v186
  %v282 = vunpack.c.l.b16 %v187
  %v283 = vunpack.c.h.b16 %v187
  %v284 = vunpack.c.l.b16 %v188
  %v285 = vunpack.c.h.b16 %v188
  %v286 = vunpack.c.l.b16 %v189
  %v287 = vunpack.c.h.b16 %v189
  %v288 = vunpack.c.l.b16 %v190
  %v289 = vunpack.c.h.b16 %v190
  %v290 = vunpack.c.l.b16 %v191
  %v291 = vunpack.c.h.b16 %v191
  %v292 = vunpack.c.l.b16 %v192
  %v293 = vunpack.c.h.b16 %v192
  %v294 = vunpack.c.l.b16 %v193
  %v295 = vunpack.c.h.b16 %v193
  %v296 = vunpack.c.l.b16 %v194
  %v297 = vunpack.c.h.b16 %v194
  %v298 = vunpack.c.l.b16 %v195
  %v299 = vunpack.c.h.b16 %v195
  %v300 = vunpack.c.l.b16 %v196
  %v301 = vunpack.c.h.b16 %v196
  %v302 = vunpack.c.l.b16 %v197
  %v303 = vunpack.c.h.b16 %v197
  %v304 = vunpack.c.l.b16 %v198
  %v305 = vunpack.c.h.b16 %v198
  %v306 = vunpack.c.l.b16 %v199
  %v307 = vunpack.c.h.b16 %v199
  %v308 = vpack.c.b16 %v246, %v244
  %v309 = vpack.c.b16 %v247, %v245
  %v310 = vpack.c.b16 %v250, %v248
  %v311 = vpack.c.b16 %v251, %v249
  %v312 = vpack.c.b16 %v254, %v252
  %v313 = vpack.c.b16 %v255, %v253
  %v314 = vpack.c.b16 %v258, %v256
  %v315 = vpack.c.b16 %v259, %v257
  %v316 = vpack.c.b16 %v262, %v260
  %v317 = vpack.c.b16 %v263, %v261
  %v318 = vpack.c.b16 %v266, %v264
  %v319 = vpack.c.b16 %v267, %v265
  %v320 = vpack.c.b16 %v270, %v268
  %v321 = vpack.c.b16 %v271, %v269
  %v322 = vpack.c.b16 %v274, %v272
  %v323 = vpack.c.b16 %v275, %v273
  %v324 = vpack.c.b16 %v278, %v276
  %v325 = vpack.c.b16 %v279, %v277
  %v326 = vpack.c.b16 %v282, %v280
  %v327 = vpack.c.b16 %v283, %v281
  %v328 = vpack.c.b16 %v286, %v284
  %v329 = vpack.c.b16 %v287, %v285
  %v330 = vpack.c.b16 %v290, %v288
  %v331 = vpack.c.b16 %v291, %v289
  %v332 = vpack.c.b16 %v294, %v292
  %v333 = vpack.c.b16 %v295, %v293
  %v334 = vpack.c.b16 %v298, %v296
  %v335 = vpack.c.b16 %v299, %v297
  %v336 = vpack.c.b16 %v302, %v300
  %v337 = vpack.c.b16 %v303, %v301
  %v338 = vpack.c.b16 %v306, %v304
  %v339 = vpack.c.b16 %v307, %v305
  %372 = vmatprep.subr.bf16.mxu0 %v309
  %373 = vmatpush1.bf16.msra.mxu0 %v308
  %374 = vmatprep.subr.bf16.mxu0 %v311
  %375 = vmatpush1.bf16.msra.mxu0 %v310
  %376 = vmatprep.subr.bf16.mxu0 %v313
  %377 = vmatpush1.bf16.msra.mxu0 %v312
  %378 = vmatprep.subr.bf16.mxu0 %v315
  %379 = vmatpush1.bf16.msra.mxu0 %v314
  %380 = vmatprep.subr.bf16.mxu0 %v317
  %381 = vmatpush1.bf16.msra.mxu0 %v316
  %382 = vmatprep.subr.bf16.mxu0 %v319
  %383 = vmatpush1.bf16.msra.mxu0 %v318
  %384 = vmatprep.subr.bf16.mxu0 %v321
  %385 = vmatpush1.bf16.msra.mxu0 %v320
  %386 = vmatprep.subr.bf16.mxu0 %v323
  %387 = vmatpush1.bf16.msra.mxu0 %v322
  %388 = vmatprep.subr.bf16.mxu0 %v325
  %389 = vmatpush1.bf16.msra.mxu0 %v324
  %390 = vmatprep.subr.bf16.mxu0 %v327
  %391 = vmatpush1.bf16.msra.mxu0 %v326
  %392 = vmatprep.subr.bf16.mxu0 %v329
  %393 = vmatpush1.bf16.msra.mxu0 %v328
  %394 = vmatprep.subr.bf16.mxu0 %v331
  %395 = vmatpush1.bf16.msra.mxu0 %v330
  %396 = vmatprep.subr.bf16.mxu0 %v333
  %397 = vmatpush1.bf16.msra.mxu0 %v332
  %398 = vmatprep.subr.bf16.mxu0 %v335
  %399 = vmatpush1.bf16.msra.mxu0 %v334
  %400 = vmatprep.subr.bf16.mxu0 %v337
  %401 = vmatpush1.bf16.msra.mxu0 %v336
  %402 = vmatprep.subr.bf16.mxu0 %v339
  %403 = vmatpush1.bf16.msra.mxu0 %v338
  %404 = vmatprep.mubr.bf16.mxu0 %v161
  %405 = vmatmul.mubr.bf16.gmra.mrb[0].mxu0 %v160
  %v406 = vpop.f32.mrb[0].mxu0
  %v407 = vadd.f32 %v205, %v406
  %v408 = vpop.f32.mrb[0].mxu0
  %v409 = vadd.f32 %v209, %v408
  %v410 = vpop.f32.mrb[0].mxu0
  %v411 = vadd.f32 %v205, %v410
  %v412 = vpop.f32.mrb[0].mxu0
  %v413 = vadd.f32 %v209, %v412
  %414 = vmatprep.mubr.bf16.mxu0 %v163
  %415 = vmatmul.mubr.bf16.gmra.mrb[0].mxu0 %v162
  %v416 = vpop.f32.mrb[0].mxu0
  %v417 = vadd.f32 %v205, %v416
  %v418 = vpop.f32.mrb[0].mxu0
  %v419 = vadd.f32 %v209, %v418
  %v420 = vpop.f32.mrb[0].mxu0
  %v421 = vadd.f32 %v205, %v420
  %v422 = vpop.f32.mrb[0].mxu0
  %v423 = vadd.f32 %v209, %v422
  %424 = vmatprep.mubr.bf16.mxu0 %v165
  %425 = vmatmul.mubr.bf16.gmra.mrb[0].mxu0 %v164
  %v426 = vpop.f32.mrb[0].mxu0
  %v427 = vadd.f32 %v205, %v426
  %v428 = vpop.f32.mrb[0].mxu0
  %v429 = vadd.f32 %v209, %v428
  %v430 = vpop.f32.mrb[0].mxu0
  %v431 = vadd.f32 %v205, %v430
  %v432 = vpop.f32.mrb[0].mxu0
  %v433 = vadd.f32 %v209, %v432
  %434 = vmatprep.mubr.bf16.mxu0 %v167
  %435 = vmatmul.mubr.bf16.gmra.mrb[0].mxu0 %v166
  %v436 = vpop.f32.mrb[0].mxu0
  %v437 = vadd.f32 %v205, %v436
  %v438 = vpop.f32.mrb[0].mxu0
  %v439 = vadd.f32 %v209, %v438
  %v440 = vpop.f32.mrb[0].mxu0
  %v441 = vadd.f32 %v205, %v440
  %v442 = vpop.f32.mrb[0].mxu0
  %v443 = vadd.f32 %v209, %v442
  %444 = vdwg.mxu0
  %v445 = vpack.c.bf16 %v411, %v407
  %v446 = vpack.c.bf16 %v413, %v409
  %v447 = vpack.c.bf16 %v421, %v417
  %v448 = vpack.c.bf16 %v423, %v419
  %v449 = vpack.c.bf16 %v431, %v427
  %v450 = vpack.c.bf16 %v433, %v429
  %v451 = vpack.c.bf16 %v441, %v437
  %v452 = vpack.c.bf16 %v443, %v439
  %v461 = vunpack.c.l.b16 %v445
  %v462 = vunpack.c.l.b16 %v446
  %v463 = vunpack.c.h.b16 %v445
  %v464 = vunpack.c.h.b16 %v446
  %v465 = vunpack.c.l.b16 %v447
  %v466 = vunpack.c.l.b16 %v448
  %v467 = vunpack.c.h.b16 %v447
  %v468 = vunpack.c.h.b16 %v448
  %v469 = vunpack.c.l.b16 %v449
  %v470 = vunpack.c.l.b16 %v450
  %v471 = vunpack.c.h.b16 %v449
  %v472 = vunpack.c.h.b16 %v450
  %v473 = vunpack.c.l.b16 %v451
  %v474 = vunpack.c.l.b16 %v452
  %v475 = vunpack.c.h.b16 %v451
  %v476 = vunpack.c.h.b16 %v452
  %v477 = vpack.c.b16 %v462, %v461
  %v478 = vpack.c.b16 %v464, %v463
  %v479 = vpack.c.b16 %v466, %v465
  %v480 = vpack.c.b16 %v468, %v467
  %v481 = vpack.c.b16 %v470, %v469
  %v482 = vpack.c.b16 %v472, %v471
  %v483 = vpack.c.b16 %v474, %v473
  %v484 = vpack.c.b16 %v476, %v475
  %493 = vst [vmem:[%s4] sm:$0xff] %v477
  %494 = vst [vmem:[%s4 + $0x8] sm:$0xff] %v478
  %495 = vst [vmem:[%s4 + $0x10] sm:$0xff] %v479
  %496 = vst [vmem:[%s4 + $0x18] sm:$0xff] %v480
  %497 = vst [vmem:[%s4 + $0x20] sm:$0xff] %v481
  %498 = vst [vmem:[%s4 + $0x28] sm:$0xff] %v482
  %499 = vst [vmem:[%s4 + $0x30] sm:$0xff] %v483
  %500 = vst [vmem:[%s4 + $0x38] sm:$0xff] %v484
  // Predicated region
  $region14: #{pixpro_forward.8} parent=0 // pred_check
    _
  $region15: #{pixpro_forward.8} parent=0 // pred_check_branch
    %502 = sbr.rel (0) target = $region17
  $region16: #{pixpro_forward.8} parent=0 // pred_region
    _
  $region17: #{pixpro_forward.8} parent=0 // pred_fallthru
    _
  // Predicated region
  $region18: #{pixpro_forward.8} parent=0 // pred_check
    _
  $region19: #{pixpro_forward.8} parent=0 // pred_check_branch
    %504 = sbr.rel (0) target = $region21
  $region20: #{pixpro_forward.8} parent=0 // pred_region
    _
  $region21: #{pixpro_forward.8} parent=0 // pred_fallthru
    _
  // Predicated region
  $region22: #{pixpro_forward.8} parent=0 // pred_check
    _
  $region23: #{pixpro_forward.8} parent=0 // pred_check_branch
    %506 = sbr.rel (0) target = $region25
  $region24: #{pixpro_forward.8} parent=0 // pred_region
    _
  $region25: #{pixpro_forward.8} parent=0 // pred_fallthru
    _
  // Predicated region
  $region26: #{pixpro_forward.8} parent=0 // pred_check
    _
  $region27: #{pixpro_forward.8} parent=0 // pred_check_branch
    %508 = sbr.rel (0) target = $region29
  $region28: #{pixpro_forward.8} parent=0 // pred_region
    _
  $region29: #{pixpro_forward.8} parent=0 // pred_fallthru
    _

// kernel: pixpro_forward.9
$region0: #{pixpro_forward.9}
  #allocation0 [shape = 'u32[]', space=smem, size = 0x4, offset = 0x4, fixed_abs, tag = 'smem constant byte address 0x4 - core index']
  #allocation1 [shape = 'u32[144,128]{1,0:T(1,128)}', space=vmem, size = 0x12000, scoped, tag = 'internal scratch']
  %s0 = inlined_call_operand.vmem [shape: bf16[4,16,256], index: 0, kind: input, shape index: {}, may-alias: {0,1}]
  %s1 = inlined_call_operand.vmem [shape: bf16[4,16,256], index: 1, kind: input, shape index: {}, may-alias: {0,1}]
  %s2 = inlined_call_operand.vmem [shape: bf16[4,16,256], index: 2, kind: input, shape index: {}]
  %s3 = inlined_call_operand.vmem [shape: f32[4,16,256], index: 3, kind: output, shape index: {}]
  %s4 = sld [smem:[#allocation0]]
  $region45: #{pixpro_forward.9} parent=0
    _
  %s6 = ssub.s32 1, %s4
  %s7 = scalar_select 0, %s6, %s4
  loop: start=0, step=1, limit=6
  $region2: #{pixpro_forward.9} parent=0 // loop_pre_header
    _
  $region3: #{pixpro_forward.9} parent=0 // loop_header
    %s9 = sphi 0, %s13
    %p10 = scmp.ge.s32.totalorder %s9, 6
    %s16 = sphi 0, %s28
    %s17 = sphi 0, %s24
    %s18 = sphi 0, %s16
    %s19 = sphi 0, %s17
    %s20 = sphi 0, %s18
    %s21 = sphi 0, %s19
    %s33 = sphi 0, %s35
    %s36 = sphi 0, %s33
    %s37 = sphi 0, %s36
    %s53 = sphi 0, %s37
    %s59 = sphi 0, %s61
    %s62 = sphi 0, %s59
    %s63 = sphi 0, %s62
    %s79 = sphi 0, %s63
    %s85 = sphi 0, %s87
    %s88 = sphi 0, %s85
    %s89 = sphi 0, %s88
    %s105 = sphi 0, %s89
    %s113 = sphi 0, %s115
    %s116 = sphi 0, %s113
    %s117 = sphi 0, %s116
    %s133 = sphi 0, %s117
  $region4: #{pixpro_forward.9} parent=0 // loop_header_branch
    %12 = sbr.rel (%p10) target = $region8
  $region5: #{pixpro_forward.9} parent=0 // loop_body
    %s14 = ssub.s32 %s9, 1
    %s15 = ssub.s32 %s9, 2
    %s22 = sadd.s32 1, %s17
    %p23 = scmp.ge.s32.totalorder %s22, 1
    %s24 = scalar_select %p23, 0, %s22
    %s25 = sadd.s32 1, %s16
    %s26 = scalar_select %p23, %s25, %s16
    %p27 = scmp.ge.s32.totalorder %s26, 4
    %s28 = scalar_select %p27, 0, %s26
    %s29 = ssub.s32 %s16, %s28
    %s30 = ssub.s32 %s17, %s24
    %s31 = sor.u32 %s29, %s30
    %p32 = scmp.eq.s32.totalorder %s31, 0
    %s34 = sadd.s32 %s33, 1
    %s35 = scalar_select %p32, %s33, %s34
    %p38 = pneg %p32
    %p39 = scmp.eq.s32.totalorder %s9, 3
    %p40 = por %p38, %p39
    %p41 = scmp.ne.s32.totalorder %s33, %s36
    %p42 = scmp.eq.s32.totalorder %s9, 0
    %p43 = por %p41, %p42
    %p44 = scmp.ne.s32.totalorder %s33, %s36
    %p45 = scmp.eq.s32.totalorder %s14, 3
    %p46 = por %p44, %p45
    %p47 = scmp.ne.s32.totalorder %s36, %s37
    %p48 = scmp.eq.s32.totalorder %s14, 0
    %p49 = por %p47, %p48
    %p50 = scmp.ne.s32.totalorder %s36, %s37
    %p51 = scmp.eq.s32.totalorder %s15, 3
    %p52 = por %p50, %p51
    %p54 = scmp.ne.s32.totalorder %s37, %s53
    %p55 = scmp.eq.s32.totalorder %s15, 0
    %p56 = por %p54, %p55
    %s57 = ssub.s32 %s16, %s28
    %p58 = scmp.eq.s32.totalorder %s57, 0
    %s60 = sadd.s32 %s59, 1
    %s61 = scalar_select %p58, %s59, %s60
    %p64 = pneg %p58
    %p65 = scmp.eq.s32.totalorder %s9, 3
    %p66 = por %p64, %p65
    %p67 = scmp.ne.s32.totalorder %s59, %s62
    %p68 = scmp.eq.s32.totalorder %s9, 0
    %p69 = por %p67, %p68
    %p70 = scmp.ne.s32.totalorder %s59, %s62
    %p71 = scmp.eq.s32.totalorder %s14, 3
    %p72 = por %p70, %p71
    %p73 = scmp.ne.s32.totalorder %s62, %s63
    %p74 = scmp.eq.s32.totalorder %s14, 0
    %p75 = por %p73, %p74
    %p76 = scmp.ne.s32.totalorder %s62, %s63
    %p77 = scmp.eq.s32.totalorder %s15, 3
    %p78 = por %p76, %p77
    %p80 = scmp.ne.s32.totalorder %s63, %s79
    %p81 = scmp.eq.s32.totalorder %s15, 0
    %p82 = por %p80, %p81
    %s83 = ssub.s32 %s16, %s28
    %p84 = scmp.eq.s32.totalorder %s83, 0
    %s86 = sadd.s32 %s85, 1
    %s87 = scalar_select %p84, %s85, %s86
    %p90 = pneg %p84
    %p91 = scmp.eq.s32.totalorder %s9, 3
    %p92 = por %p90, %p91
    %p93 = scmp.ne.s32.totalorder %s85, %s88
    %p94 = scmp.eq.s32.totalorder %s9, 0
    %p95 = por %p93, %p94
    %p96 = scmp.ne.s32.totalorder %s85, %s88
    %p97 = scmp.eq.s32.totalorder %s14, 3
    %p98 = por %p96, %p97
    %p99 = scmp.ne.s32.totalorder %s88, %s89
    %p100 = scmp.eq.s32.totalorder %s14, 0
    %p101 = por %p99, %p100
    %p102 = scmp.ne.s32.totalorder %s88, %s89
    %p103 = scmp.eq.s32.totalorder %s15, 3
    %p104 = por %p102, %p103
    %p106 = scmp.ne.s32.totalorder %s89, %s105
    %p107 = scmp.eq.s32.totalorder %s15, 0
    %p108 = por %p106, %p107
    %s109 = ssub.s32 %s16, %s28
    %s110 = ssub.s32 %s17, %s24
    %s111 = sor.u32 %s109, %s110
    %p112 = scmp.eq.s32.totalorder %s111, 0
    %s114 = sadd.s32 %s113, 1
    %s115 = scalar_select %p112, %s113, %s114
    %p118 = pneg %p112
    %p119 = scmp.eq.s32.totalorder %s9, 3
    %p120 = por %p118, %p119
    %p121 = scmp.ne.s32.totalorder %s113, %s116
    %p122 = scmp.eq.s32.totalorder %s9, 0
    %p123 = por %p121, %p122
    %p124 = scmp.ne.s32.totalorder %s113, %s116
    %p125 = scmp.eq.s32.totalorder %s14, 3
    %p126 = por %p124, %p125
    %p127 = scmp.ne.s32.totalorder %s116, %s117
    %p128 = scmp.eq.s32.totalorder %s14, 0
    %p129 = por %p127, %p128
    %p130 = scmp.ne.s32.totalorder %s116, %s117
    %p131 = scmp.eq.s32.totalorder %s15, 3
    %p132 = por %p130, %p131
    %p134 = scmp.ne.s32.totalorder %s117, %s133
    %p135 = scmp.eq.s32.totalorder %s15, 0
    %p136 = por %p134, %p135
    %p137 = scmp.le.s32.totalorder 1, %s9
    %p138 = scmp.lt.s32.totalorder %s9, 5
    %p139 = pnand %p137, %p138
    %p140 = pneg %p139
    // Predicated region
    $region9: #{pixpro_forward.9} parent=5 // pred_check
      _
    $region10: #{pixpro_forward.9} parent=5 // pred_check_branch
      %142 = sbr.rel (%p139) target = $region12
    $region11: #{pixpro_forward.9} parent=5 // pred_region
      %s143 = ssub.s32 %s9, 1
    $region12: #{pixpro_forward.9} parent=5 // pred_fallthru
      _
    %p144 = scmp.lt.s32.totalorder %s9, 4
    // Predicated region
    $region13: #{pixpro_forward.9} parent=5 // pred_check
      %p145 = pneg %p144
    $region14: #{pixpro_forward.9} parent=5 // pred_check_branch
      %147 = sbr.rel (%p145) target = $region16
    $region15: #{pixpro_forward.9} parent=5 // pred_region
      // Predicated region
      $region17: #{pixpro_forward.9} parent=15 // pred_check
        %p148 = pneg %p43
      $region18: #{pixpro_forward.9} parent=15 // pred_check_branch
        %150 = sbr.rel (%p148) target = $region20
      $region19: #{pixpro_forward.9} parent=15 // pred_region
        %s151 = smul.u32 2, %s17
        %p152 = scmp.lt.s32.totalorder %s16, 3
        %s153 = scalar_select %p152, %s16, 3
        %p154 = scmp.lt.s32.totalorder %s151, 1
        %s155 = scalar_select %p154, %s151, 1
        %s156 = smul.addr %s155, 2
        %s157 = smul.addr %s153, 4
        %s158 = sadd.s32 %s156, %s157
        %s159 = smul.addr %s158, 4
        %s160 = scalar_lea.vmem %s0, %s159
        %s161 = smul.u32 2, %s17
      $region20: #{pixpro_forward.9} parent=15 // pred_fallthru
        _
      // Predicated region
      $region21: #{pixpro_forward.9} parent=15 // pred_check
        %p162 = pneg %p69
      $region22: #{pixpro_forward.9} parent=15 // pred_check_branch
        %164 = sbr.rel (%p162) target = $region24
      $region23: #{pixpro_forward.9} parent=15 // pred_region
        %p165 = scmp.lt.s32.totalorder %s16, 3
        %s166 = scalar_select %p165, %s16, 3
        %s167 = smul.addr %s166, 4
        %s168 = smul.addr %s167, 4
        %s169 = scalar_lea.vmem %s1, %s168
      $region24: #{pixpro_forward.9} parent=15 // pred_fallthru
        _
      // Predicated region
      $region25: #{pixpro_forward.9} parent=15 // pred_check
        %p170 = pneg %p95
      $region26: #{pixpro_forward.9} parent=15 // pred_check_branch
        %172 = sbr.rel (%p170) target = $region28
      $region27: #{pixpro_forward.9} parent=15 // pred_region
        %p173 = scmp.lt.s32.totalorder %s16, 3
        %s174 = scalar_select %p173, %s16, 3
        %s175 = smul.addr %s174, 4
        %s176 = smul.addr %s175, 4
        %s177 = scalar_lea.vmem %s2, %s176
      $region28: #{pixpro_forward.9} parent=15 // pred_fallthru
        _
    $region16: #{pixpro_forward.9} parent=5 // pred_fallthru
      _
    %p178 = scmp.le.s32.totalorder 1, %s9
    %p179 = scmp.lt.s32.totalorder %s9, 5
    %p180 = pnand %p178, %p179
    %p181 = pneg %p180
    // Predicated region
    $region29: #{pixpro_forward.9} parent=5 // pred_check
      _
    $region30: #{pixpro_forward.9} parent=5 // pred_check_branch
      %183 = sbr.rel (%p180) target = $region32
    $region31: #{pixpro_forward.9} parent=5 // pred_region
      %s184 = ssub.s32 %s9, 1
      %s185 = smul.u32 2, %s19
      %p186 = scmp.lt.s32.totalorder %s18, 3
      %s187 = scalar_select %p186, %s18, 3
      %p188 = scmp.lt.s32.totalorder %s185, 1
      %s189 = scalar_select %p188, %s185, 1
      %s190 = smul.addr %s189, 2
      %s191 = smul.addr %s187, 4
      %s192 = sadd.s32 %s190, %s191
      %s193 = smul.addr %s192, 4
      %s194 = scalar_lea.vmem %s0, %s193
      %p195 = pneg %p49
      %p196 = pneg %p46
      %p197 = scmp.lt.s32.totalorder %s18, 3
      %s198 = scalar_select %p197, %s18, 3
      %s199 = smul.addr %s198, 4
      %s200 = smul.addr %s199, 4
      %s201 = scalar_lea.vmem %s1, %s200
      %p202 = pneg %p75
      %p203 = pneg %p72
      %p204 = scmp.lt.s32.totalorder %s18, 3
      %s205 = scalar_select %p204, %s18, 3
      %s206 = smul.addr %s205, 4
      %s207 = smul.addr %s206, 4
      %s208 = scalar_lea.vmem %s2, %s207
      %p209 = pneg %p101
      %p210 = pneg %p98
      %p211 = pneg %p129
      %p212 = pneg %p126
      %s213 = smul.u32 2, %s19
      %p214 = scmp.lt.s32.totalorder %s18, 3
      %s215 = scalar_select %p214, %s18, 3
      %p216 = scmp.lt.s32.totalorder %s213, 1
      %s217 = scalar_select %p216, %s213, 1
      %s218 = smul.addr %s217, 2
      %s219 = smul.addr %s215, 4
      %s220 = sadd.s32 %s218, %s219
      %s221 = smul.addr %s220, 8
      %s222 = scalar_lea.vmem %s3, %s221
      %s223 = smul.u32 2, %s19
      %p224 = scmp.lt.s32.totalorder %s18, 3
      %s225 = scalar_select %p224, %s18, 3
      %p226 = scmp.lt.s32.totalorder %s223, 1
      %s227 = scalar_select %p226, %s223, 1
      %s228 = smul.addr %s227, 2
      %s229 = smul.addr %s225, 4
      %s230 = sadd.s32 %s228, %s229
      %s231 = smul.addr %s230, 4
      %s232 = scalar_lea.vmem %s0, %s231
      %s233 = smul.u32 2, %s19
      %p234 = scmp.lt.s32.totalorder %s18, 3
      %s235 = scalar_select %p234, %s18, 3
      %s236 = smul.addr %s235, 4
      %s237 = smul.addr %s236, 4
      %s238 = scalar_lea.vmem %s1, %s237
      %p239 = scmp.lt.s32.totalorder %s18, 3
      %s240 = scalar_select %p239, %s18, 3
      %s241 = smul.addr %s240, 4
      %s242 = smul.addr %s241, 4
      %s243 = scalar_lea.vmem %s2, %s242
      %s244 = smul.u32 2, %s19
      %p245 = scmp.lt.s32.totalorder %s18, 3
      %s246 = scalar_select %p245, %s18, 3
      %p247 = scmp.lt.s32.totalorder %s244, 1
      %s248 = scalar_select %p247, %s244, 1
      %s249 = smul.addr %s248, 2
      %s250 = smul.addr %s246, 4
      %s251 = sadd.s32 %s249, %s250
      %s252 = smul.addr %s251, 8
      %s253 = scalar_lea.vmem %s3, %s252
      %s254 = smul.u32 2, %s19
      %v256 = vld [vmem:[%s232] sm:$0xff]
      %v257 = vld [vmem:[%s232 + $0x8] sm:$0xff]
      %v258 = vld [vmem:[%s238] sm:$0xff]
      %v259 = vld [vmem:[%s238 + $0x8] sm:$0xff]
      %v262 = vunpack.c.l.b16 %v256
      %v263 = vunpack.c.h.b16 %v256
      %v264 = vunpack.c.l.b16 %v257
      %v265 = vunpack.c.h.b16 %v257
      %v266 = vpack.c.b16 %v264, %v262
      %v267 = vpack.c.b16 %v265, %v263
      %v272 = vunpack.c.l.b16 %v258
      %v273 = vunpack.c.h.b16 %v258
      %v274 = vunpack.c.l.b16 %v259
      %v275 = vunpack.c.h.b16 %v259
      %v276 = vpack.c.b16 %v274, %v272
      %v277 = vpack.c.b16 %v275, %v273
      %280 = vmatprep.subr.bf16.mxu0 %v277
      %281 = vmatpush1.bf16.xpose.msra.mxu0 %v276
      %282 = vmatprep.subr.bf16.mxu0 0
      %283 = vmatpush1.bf16.xpose.msra.mxu0 0
      %284 = vmatprep.subr.bf16.mxu0 0
      %285 = vmatpush1.bf16.xpose.msra.mxu0 0
      %286 = vmatprep.subr.bf16.mxu0 0
      %287 = vmatpush1.bf16.xpose.msra.mxu0 0
      %288 = vmatprep.subr.bf16.mxu0 0
      %289 = vmatpush1.bf16.xpose.msra.mxu0 0
      %290 = vmatprep.subr.bf16.mxu0 0
      %291 = vmatpush1.bf16.xpose.msra.mxu0 0
      %292 = vmatprep.subr.bf16.mxu0 0
      %293 = vmatpush1.bf16.xpose.msra.mxu0 0
      %294 = vmatprep.subr.bf16.mxu0 0
      %295 = vmatpush1.bf16.xpose.msra.mxu0 0
      %296 = vmatprep.subr.bf16.mxu0 0
      %297 = vmatpush1.bf16.xpose.msra.mxu0 0
      %298 = vmatprep.subr.bf16.mxu0 0
      %299 = vmatpush1.bf16.xpose.msra.mxu0 0
      %300 = vmatprep.subr.bf16.mxu0 0
      %301 = vmatpush1.bf16.xpose.msra.mxu0 0
      %302 = vmatprep.subr.bf16.mxu0 0
      %303 = vmatpush1.bf16.xpose.msra.mxu0 0
      %304 = vmatprep.subr.bf16.mxu0 0
      %305 = vmatpush1.bf16.xpose.msra.mxu0 0
      %306 = vmatprep.subr.bf16.mxu0 0
      %307 = vmatpush1.bf16.xpose.msra.mxu0 0
      %308 = vmatprep.subr.bf16.mxu0 0
      %309 = vmatpush1.bf16.xpose.msra.mxu0 0
      %310 = vmatprep.subr.bf16.mxu0 0
      %311 = vmatpush1.bf16.xpose.msra.mxu0 0
      %312 = vmatprep.mubr.bf16.mxu0 %v267
      %313 = vmatmul.mubr.bf16.gmra.mrb[0].mxu0 %v266
      %v314 = vpop.f32.mrb[0].mxu0
      %v315 = vadd.f32 0.0, %v314
      %v316 = vpop.f32.mrb[0].mxu0
      %v317 = vpop.f32.mrb[0].mxu0
      %v318 = vadd.f32 0.0, %v317
      %v319 = vpop.f32.mrb[0].mxu0
      %320 = vdwg.mxu0
      %v321 = vmax.f32 %v315, 0.0
      %v322 = vmax.f32 %v318, 0.0
      %v323 = vmul.f32 %v321, %v321
      %v324 = vmul.f32 %v322, %v322
      %v325 = vpack.c.bf16 %v324, %v323
      %v326 = vld [vmem:[%s243] sm:$0xff]
      %v327 = vld [vmem:[%s243 + $0x8] sm:$0xff]
      %v330 = vunpack.c.l.b16 %v326
      %v331 = vunpack.c.h.b16 %v326
      %v332 = vunpack.c.l.b16 %v327
      %v333 = vunpack.c.h.b16 %v327
      %v334 = vpack.c.b16 %v332, %v330
      %v335 = vpack.c.b16 %v333, %v331
      %vm338 = vcmask 130048
      %v340 = vsel %vm338, %v325, 0
      %342 = vmatprep.subr.bf16.mxu0 %v335
      %343 = vmatpush1.bf16.msra.mxu0 %v334
      %344 = vmatprep.subr.bf16.mxu0 0
      %345 = vmatpush1.bf16.msra.mxu0 0
      %346 = vmatprep.subr.bf16.mxu0 0
      %347 = vmatpush1.bf16.msra.mxu0 0
      %348 = vmatprep.subr.bf16.mxu0 0
      %349 = vmatpush1.bf16.msra.mxu0 0
      %350 = vmatprep.subr.bf16.mxu0 0
      %351 = vmatpush1.bf16.msra.mxu0 0
      %352 = vmatprep.subr.bf16.mxu0 0
      %353 = vmatpush1.bf16.msra.mxu0 0
      %354 = vmatprep.subr.bf16.mxu0 0
      %355 = vmatpush1.bf16.msra.mxu0 0
      %356 = vmatprep.subr.bf16.mxu0 0
      %357 = vmatpush1.bf16.msra.mxu0 0
      %358 = vmatprep.subr.bf16.mxu0 0
      %359 = vmatpush1.bf16.msra.mxu0 0
      %360 = vmatprep.subr.bf16.mxu0 0
      %361 = vmatpush1.bf16.msra.mxu0 0
      %362 = vmatprep.subr.bf16.mxu0 0
      %363 = vmatpush1.bf16.msra.mxu0 0
      %364 = vmatprep.subr.bf16.mxu0 0
      %365 = vmatpush1.bf16.msra.mxu0 0
      %366 = vmatprep.subr.bf16.mxu0 0
      %367 = vmatpush1.bf16.msra.mxu0 0
      %368 = vmatprep.subr.bf16.mxu0 0
      %369 = vmatpush1.bf16.msra.mxu0 0
      %370 = vmatprep.subr.bf16.mxu0 0
      %371 = vmatpush1.bf16.msra.mxu0 0
      %372 = vmatprep.subr.bf16.mxu0 0
      %373 = vmatpush1.bf16.msra.mxu0 0
      %374 = vmatprep.mubr.bf16.mxu0 0
      %375 = vmatmul.mubr.bf16.gmra.mrb[0].mxu0 %v340
      %v376 = vpop.f32.mrb[0].mxu0
      %v377 = vadd.f32 0.0, %v376
      %v378 = vpop.f32.mrb[0].mxu0
      %v379 = vadd.f32 0.0, %v378
      %v380 = vpop.f32.mrb[0].mxu0
      %v381 = vadd.f32 0.0, %v380
      %v382 = vpop.f32.mrb[0].mxu0
      %v383 = vadd.f32 0.0, %v382
      %384 = vdwg.mxu0
      %385 = vst [vmem:[%s253] sm:$0xff] %v377
      %386 = vst [vmem:[%s253 + $0x8] sm:$0xff] %v379
      %387 = vst [vmem:[%s253 + $0x10] sm:$0xff] %v381
      %388 = vst [vmem:[%s253 + $0x18] sm:$0xff] %v383
      %s389 = smul.u32 2, %s19
      %p390 = scmp.lt.s32.totalorder %s18, 3
      %s391 = scalar_select %p390, %s18, 3
      %p392 = scmp.lt.s32.totalorder %s389, 1
      %s393 = scalar_select %p392, %s389, 1
      %s394 = smul.addr %s393, 2
      %s395 = smul.addr %s391, 4
      %s396 = sadd.s32 %s394, %s395
      %s397 = smul.addr %s396, 8
      %s398 = scalar_lea.vmem %s3, %s397
      // Predicated region
      $region33: #{pixpro_forward.9} parent=31 // pred_check
        %p399 = pneg %p126
      $region34: #{pixpro_forward.9} parent=31 // pred_check_branch
        %401 = sbr.rel (%p399) target = $region36
      $region35: #{pixpro_forward.9} parent=31 // pred_region
        %s402 = smul.u32 2, %s19
      $region36: #{pixpro_forward.9} parent=31 // pred_fallthru
        _
    $region32: #{pixpro_forward.9} parent=5 // pred_fallthru
      _
    %p403 = scmp.le.s32.totalorder 2, %s9
    // Predicated region
    $region37: #{pixpro_forward.9} parent=5 // pred_check
      %p404 = pneg %p403
    $region38: #{pixpro_forward.9} parent=5 // pred_check_branch
      %406 = sbr.rel (%p404) target = $region40
    $region39: #{pixpro_forward.9} parent=5 // pred_region
      %s407 = ssub.s32 %s9, 2
      // Predicated region
      $region41: #{pixpro_forward.9} parent=39 // pred_check
        %p408 = pneg %p132
      $region42: #{pixpro_forward.9} parent=39 // pred_check_branch
        %410 = sbr.rel (%p408) target = $region44
      $region43: #{pixpro_forward.9} parent=39 // pred_region
        %s411 = smul.u32 2, %s21
        %p412 = scmp.lt.s32.totalorder %s20, 3
        %s413 = scalar_select %p412, %s20, 3
        %p414 = scmp.lt.s32.totalorder %s411, 1
        %s415 = scalar_select %p414, %s411, 1
        %s416 = smul.addr %s415, 2
        %s417 = smul.addr %s413, 4
        %s418 = sadd.s32 %s416, %s417
        %s419 = smul.addr %s418, 8
        %s420 = scalar_lea.vmem %s3, %s419
      $region44: #{pixpro_forward.9} parent=39 // pred_fallthru
        _
    $region40: #{pixpro_forward.9} parent=5 // pred_fallthru
      _
  $region6: #{pixpro_forward.9} parent=0 // loop_footer
    %s13 = sadd.s32 1, %s9
  $region7: #{pixpro_forward.9} parent=0 // loop_footer_branch
    %8 = sbr.rel target = $region3
  $region8: #{pixpro_forward.9} parent=0 // loop_exit
    _

</llo_original>
